<compile_context>
chip_gen: v5e
topology: v5e:2x2
jax: 0.10.0
libtpu: 0.0.40
codegen_flags: <defaults>
</compile_context>

<pallas_src>
import functools
import math

import jax
import jax.numpy as jnp
from jax.experimental import pallas as pl
from jax.experimental.pallas import tpu as pltpu


def _round_up(x, m):
    return ((x + m - 1) // m) * m


@functools.lru_cache(maxsize=None)
def _vmem_limit_bytes():
    """Generation-aware scoped-VMEM limit (v5e/v6e: 128 MiB phys, v7x: 64 MiB)."""
    cap = 64 * 1024 * 1024  # conservative default (v7x physical VMEM)
    try:
        info = pltpu.get_tpu_info()
        cap = int(getattr(info, "vmem_capacity_bytes", cap) or cap)
    except Exception:
        pass
    # Use ~3/4 of physical VMEM, keep a sane floor/ceiling.
    return max(min((cap * 3) // 4, 100 * 1024 * 1024), 32 * 1024 * 1024)


# ----------------------------------------------------------------------------
# Fused (multi-output) linear projection kernel
# ----------------------------------------------------------------------------
def _fused_linear_kernel(x_ref, w_ref, b_ref, *o_refs, widths):
    # x_ref: (TM, K); w_ref: (K, sum(widths)); b_ref: (1, sum(widths)).
    # One MXU pass over the lane-concatenated weights; each result slice is
    # stored to its OWN output block so downstream pallas_calls never see an
    # XLA lane-slice copy of a fused projection result.
    x = x_ref[...].astype(jnp.bfloat16)
    w = w_ref[...].astype(jnp.bfloat16)
    acc = jnp.dot(x, w, preferred_element_type=jnp.float32) + b_ref[...]
    off = 0
    for o_ref, n in zip(o_refs, widths):
        o_ref[...] = acc[:, off:off + n].astype(o_ref.dtype)
        off += n


def fused_linear_pallas(x, ws, b=None, *, out_dtypes=None, tile_m=512):
    """x: (M, K); ws: list of (K, Ni) weights (already transposed vs. torch
    Linear); b: (sum(Ni),) or None. Returns a tuple of (M, Ni) outputs."""
    M, K = x.shape
    widths = tuple(int(w.shape[1]) for w in ws)
    N = sum(widths)
    wcat = ws[0] if len(ws) == 1 else jnp.concatenate(ws, axis=1)
    b2 = (jnp.zeros((1, N), jnp.float32) if b is None
          else b.reshape(1, N).astype(jnp.float32))
    if out_dtypes is None:
        out_dtypes = (x.dtype,) * len(ws)

    tm = min(tile_m, _round_up(M, 8))
    if M > 8:  # keep >=2 'parallel' grid steps so both v7x TensorCores get work
        tm = min(tm, _round_up((M + 1) // 2, 8))
    mp = _round_up(M, tm)
    xp = jnp.pad(x, ((0, mp - M), (0, 0))) if mp != M else x

    # TODO(synk): add a K grid axis (f32 accumulator) and an N axis if this is
    # ever used with non-toy dims; with K, N = O(32..96) one block is optimal.
    kernel = functools.partial(_fused_linear_kernel, widths=widths)
    outs = pl.pallas_call(
        kernel,
        out_shape=tuple(jax.ShapeDtypeStruct((mp, n), dt)
                        for n, dt in zip(widths, out_dtypes)),
        grid=(mp // tm,),
        in_specs=[
            pl.BlockSpec((tm, K), lambda i: (i, 0)),
            pl.BlockSpec((K, N), lambda i: (0, 0)),
            pl.BlockSpec((1, N), lambda i: (0, 0)),
        ],
        out_specs=tuple(pl.BlockSpec((tm, n), lambda i: (i, 0)) for n in widths),
        compiler_params=pltpu.CompilerParams(
            dimension_semantics=("parallel",),
            vmem_limit_bytes=_vmem_limit_bytes()),
    )(xp, wcat, b2)
    if mp != M:
        outs = tuple(o[:M] for o in outs)
    return tuple(outs)


# ----------------------------------------------------------------------------
# Packed-head attention kernel (serves both 'full' and 'axial')
# ----------------------------------------------------------------------------
def _packed_attention_kernel(q_ref, k_ref, v_ref, o_ref, *, n_head, d_k, d_v,
                             causal):
    # q_ref/k_ref: (G, L, n_head*d_k) bf16; v_ref: (G, L, n_head*d_v) bf16.
    # Heads stay packed in the lane dim in HBM; inside the kernel they are
    # split into a LEADING batch dim (static lane slices + major-dim concat
    # only, no lane transposes) so the whole block runs as ONE batched MXU
    # sequence + one softmax + one full-block store.
    G, L, _ = q_ref.shape
    qv, kv, vv = q_ref[...], k_ref[...], v_ref[...]
    q = jnp.concatenate([qv[:, :, h * d_k:(h + 1) * d_k]
                         for h in range(n_head)], axis=0)   # (n_head*G, L, d_k)
    k = jnp.concatenate([kv[:, :, h * d_k:(h + 1) * d_k]
                         for h in range(n_head)], axis=0)
    v = jnp.concatenate([vv[:, :, h * d_v:(h + 1) * d_v]
                         for h in range(n_head)], axis=0)   # (n_head*G, L, d_v)

    # NOTE: the 1/sqrt(d_k) softmax scale is folded into the q-projection
    # weights by the caller.
    s = jnp.einsum('bld,bmd->blm', q, k,
                   preferred_element_type=jnp.float32)      # (n_head*G, L, L) f32
    if causal:
        row = jax.lax.broadcasted_iota(jnp.int32, (L, L), 0)
        col = jax.lax.broadcasted_iota(jnp.int32, (L, L), 1)
        s = jnp.where((col <= row)[None], s, -1e30)
    # Softmax kept in f32 (bf16 EUP exp helps v6e/v7x but regresses v5e).
    s = s - jnp.max(s, axis=-1, keepdims=True)
    p = jnp.exp(s)
    p = p * pl.reciprocal(jnp.sum(p, axis=-1, keepdims=True), approx=True)
    o = jnp.einsum('blm,bmd->bld', p.astype(jnp.bfloat16), v,
                   preferred_element_type=jnp.float32)      # (n_head*G, L, d_v)
    # Re-pack heads into the lane dim and store once (lane-dense over n_head*d_v).
    o_ref[...] = jnp.concatenate([o[h * G:(h + 1) * G] for h in range(n_head)],
                                 axis=-1).astype(o_ref.dtype)


def attention_pallas(qp, kp, vp, *, n_head, d_k, d_v, causal=False):
    """qp/kp: (Bp, L, n_head*d_k); vp: (Bp, L, n_head*d_v) -> (Bp, L, n_head*d_v)
    in bf16. Grouped multi-head SDPA; attn_dropout is assumed to be 0."""
    qp = qp.astype(jnp.bfloat16)
    kp = kp.astype(jnp.bfloat16)
    vp = vp.astype(jnp.bfloat16)
    Bp, L, Cq = qp.shape
    Cv = vp.shape[-1]

    # Group size G from a generation-aware VMEM budget. Per unit of G (bytes):
    #   * double-buffered bf16 q/k/v/out blocks:   4*L*(2*Cq + 2*Cv)
    #   * in-kernel bf16 head-split copies:        2*L*(2*Cq + Cv)
    #   * f32 score block + bf16 prob block:       6*n_head*L*L
    #   * f32 attention output + packed bf16 copy: 6*L*Cv
    vlimit = _vmem_limit_bytes()
    budget = (vlimit * 3) // 5
    per_g = (4 * L * (2 * Cq + 2 * Cv) + 2 * L * (2 * Cq + Cv)
             + 6 * n_head * L * L + 6 * L * Cv)
    G = max(1, min(Bp, budget // max(per_g, 1)))
    if Bp > 1:   # keep >=2 'parallel' grid steps so both v7x TensorCores get work
        G = min(G, (Bp + 1) // 2)
    bpp = _round_up(Bp, G)
    if bpp != Bp:
        pad = ((0, bpp - Bp), (0, 0), (0, 0))
        qp, kp, vp = jnp.pad(qp, pad), jnp.pad(kp, pad), jnp.pad(vp, pad)

    # TODO(synk): for large L (= prod(shape)) add a KV grid axis with an
    # online-softmax (flash-style) accumulator instead of materializing the
    # (n_head*G, L, L) score block; unnecessary at these sizes.
    kernel = functools.partial(_packed_attention_kernel, n_head=n_head,
                               d_k=d_k, d_v=d_v, causal=causal)
    out = pl.pallas_call(
        kernel,
        out_shape=jax.ShapeDtypeStruct((bpp, L, Cv), jnp.bfloat16),
        grid=(bpp // G,),
        in_specs=[
            pl.BlockSpec((G, L, Cq), lambda i: (i, 0, 0)),
            pl.BlockSpec((G, L, Cq), lambda i: (i, 0, 0)),
            pl.BlockSpec((G, L, Cv), lambda i: (i, 0, 0)),
        ],
        out_specs=pl.BlockSpec((G, L, Cv), lambda i: (i, 0, 0)),
        compiler_params=pltpu.CompilerParams(
            dimension_semantics=("parallel",),
            vmem_limit_bytes=vlimit),
    )(qp, kp, vp)
    return out[:Bp] if bpp != Bp else out


# ----------------------------------------------------------------------------
# MultiHeadAttention forward (decode_step=None path)
# ----------------------------------------------------------------------------
def multi_head_attention(params, q, k, v, *, shape, n_head,
                         attn_type="axial", causal=False, axial_dim=-2):
    """q, k, v: (B, *shape, dim) channels-last tensors (q may be k may be v).

    attn_dropout from the torch module is assumed to be 0 (inference)."""
    n_dim = len(shape)
    d_k = params["w_qs"].shape[1] // n_head
    d_v = params["w_vs"].shape[1] // n_head
    Cq, Cv = n_head * d_k, n_head * d_v
    B = q.shape[0]
    dim_q = params["w_qs"].shape[0]
    dim_kv = params["w_ks"].shape[0]

    # Fold the 1/sqrt(d_k) softmax scale into the q-projection weight.
    w_qs = params["w_qs"] * (1.0 / math.sqrt(d_k))
    bf16 = jnp.bfloat16

    # ---- fused projections: heads stay packed in the lane dim; outputs are
    # bf16 so the attention kernel's DMA traffic is halved. -------------------
    if (q is k) and (k is v):
        qp, kp, vp = fused_linear_pallas(
            q.reshape(-1, dim_q), [w_qs, params["w_ks"], params["w_vs"]],
            out_dtypes=(bf16, bf16, bf16))
    else:
        (qp,) = fused_linear_pallas(q.reshape(-1, dim_q), [w_qs],
                                    out_dtypes=(bf16,))
        if k is v:
            kp, vp = fused_linear_pallas(
                k.reshape(-1, dim_kv), [params["w_ks"], params["w_vs"]],
                out_dtypes=(bf16, bf16))
        else:
            (kp,) = fused_linear_pallas(k.reshape(-1, dim_kv), [params["w_ks"]],
                                        out_dtypes=(bf16,))
            (vp,) = fused_linear_pallas(v.reshape(-1, dim_kv), [params["w_vs"]],
                                        out_dtypes=(bf16,))

    qp = qp.reshape((B,) + tuple(shape) + (Cq,))
    kp = kp.reshape((B,) + tuple(shape) + (Cq,))
    vp = vp.reshape((B,) + tuple(shape) + (Cv,))

    # ---- attention ----------------------------------------------------------
    if attn_type == "full":
        L = math.prod(shape)
        a = attention_pallas(qp.reshape(B, L, Cq), kp.reshape(B, L, Cq),
                             vp.reshape(B, L, Cv),
                             n_head=n_head, d_k=d_k, d_v=d_v, causal=causal)
        a = a.reshape((B,) + tuple(shape) + (Cv,))
    elif attn_type == "axial":
        assert not causal, "causal axial attention is not supported"
        # torch AxialAttention.__init__ resolves axial_dim for a (B, nh, *shape, d)
        # tensor: 2 + n_dim + 1 + axial_dim (if negative), else axial_dim + 2.
        ad = (2 + n_dim + 1 + axial_dim) if axial_dim < 0 else (axial_dim + 2)
        spatial = ad - 2                      # index into `shape`
        assert 0 <= spatial < n_dim, "axial_dim resolves outside the spatial dims"
        ax = 1 + spatial                      # axis in the (B, *shape, C) layout
        L = shape[spatial]
        # TODO(synk): for non-trailing spatial axes these moveaxis calls are
        # full-tensor XLA transposes; fold the permutation into the projection
        # out_spec index_map instead. For the default axial_dim=-2 they are no-ops.
        qs = jnp.moveaxis(qp, ax, -2)
        ks = jnp.moveaxis(kp, ax, -2)
        vs = jnp.moveaxis(vp, ax, -2)
        batch_shape = vs.shape[:-2]
        a = attention_pallas(qs.reshape(-1, L, Cq), ks.reshape(-1, L, Cq),
                             vs.reshape(-1, L, Cv),
                             n_head=n_head, d_k=d_k, d_v=d_v, causal=False)
        a = jnp.moveaxis(a.reshape(batch_shape + (L, Cv)), -2, ax)
    else:
        # TODO(synk): attn_type='sparse' relies on DeepSpeed block-sparse ops whose
        # forward is not defined in the spec; not implemented.
        raise NotImplementedError(f"attn_type={attn_type!r}")

    # Heads are already packed [h0|h1|...] in the lane dim, i.e. this layout IS
    # shift_dim(a, 1, -2).flatten(start_dim=-2) of the torch reference.
    (out,) = fused_linear_pallas(a.reshape(-1, Cv), [params["fc_w"]],
                                 b=params["fc_b"], out_dtypes=(jnp.float32,))
    return out.reshape((B,) + tuple(shape) + (dim_q,))


# ----------------------------------------------------------------------------
# Pure-JAX reference (direct port of the torch code) for validation
# ----------------------------------------------------------------------------
def mha_reference(params, q, k, v, *, shape, n_head, attn_type,
                  causal=False, axial_dim=-2):
    d_k = params["w_qs"].shape[1] // n_head
    d_v = params["w_vs"].shape[1] // n_head
    B = q.shape[0]
    qp = (q @ params["w_qs"]).reshape(q.shape[:-1] + (n_head, d_k))
    kp = (k @ params["w_ks"]).reshape(k.shape[:-1] + (n_head, d_k))
    vp = (v @ params["w_vs"]).reshape(v.shape[:-1] + (n_head, d_v))
    qp = jnp.moveaxis(qp, -2, 1)  # (B, nh, *shape, d)
    kp = jnp.moveaxis(kp, -2, 1)
    vp = jnp.moveaxis(vp, -2, 1)

    def sdpa(qq, kk, vv, mask=None):
        attn = jnp.einsum('...ld,...md->...lm', qq, kk) / math.sqrt(qq.shape[-1])
        if mask is not None:
            attn = jnp.where(mask == 0, -jnp.inf, attn)
        attn = jax.nn.softmax(attn, axis=-1)
        return jnp.einsum('...lm,...md->...ld', attn, vv)

    if attn_type == "full":
        L = math.prod(shape)
        mask = jnp.tril(jnp.ones((L, L))) if causal else None
        out = sdpa(qp.reshape(B, n_head, L, d_k), kp.reshape(B, n_head, L, d_k),
                   vp.reshape(B, n_head, L, d_v), mask)
        out = out.reshape((B, n_head) + tuple(shape) + (d_v,))
    elif attn_type == "axial":
        n_dim = len(shape)
        ad = (2 + n_dim + 1 + axial_dim) if axial_dim < 0 else (axial_dim + 2)
        qs = jnp.moveaxis(qp, ad, -2)
        ks = jnp.moveaxis(kp, ad, -2)
        vs = jnp.moveaxis(vp, ad, -2)
        old = vs.shape
        out = sdpa(qs.reshape((-1,) + qs.shape[-2:]),
                   ks.reshape((-1,) + ks.shape[-2:]),
                   vs.reshape((-1,) + vs.shape[-2:]))
        out = jnp.moveaxis(out.reshape(old), -2, ad)
    else:
        raise NotImplementedError(attn_type)

    a = jnp.moveaxis(out, 1, -2)
    a = a.reshape(a.shape[:-2] + (n_head * d_v,))
    return a @ params["fc_w"] + params["fc_b"]


# ----------------------------------------------------------------------------
# Deterministic parameter init (matches MultiHeadAttention.__init__)
# ----------------------------------------------------------------------------
def init_params(key, *, dim_q, dim_kv, n_head, n_layer):
    d_k = dim_q // n_head
    d_v = dim_kv // n_head
    k1, k2, k3, k4, k5 = jax.random.split(key, 5)
    return dict(
        w_qs=(1.0 / math.sqrt(dim_q)) *
             jax.random.normal(k1, (dim_q, n_head * d_k), jnp.float32),
        w_ks=(1.0 / math.sqrt(dim_kv)) *
             jax.random.normal(k2, (dim_kv, n_head * d_k), jnp.float32),
        w_vs=(1.0 / math.sqrt(dim_kv)) *
             jax.random.normal(k3, (dim_kv, n_head * d_v), jnp.float32),
        fc_w=(1.0 / math.sqrt(dim_q * n_layer)) *
             jax.random.normal(k4, (n_head * d_v, dim_q), jnp.float32),
        fc_b=0.01 * jax.random.normal(k5, (dim_q,), jnp.float32),
    )


if __name__ == "__main__":
    key = jax.random.PRNGKey(0)
    pkey, xkey = jax.random.split(key)

    B, shape, dim_q, dim_kv, n_head, n_layer = 2, (8, 8), 32, 32, 4, 1
    params = init_params(pkey, dim_q=dim_q, dim_kv=dim_kv,
                         n_head=n_head, n_layer=n_layer)
    x = jax.random.normal(xkey, (B,) + shape + (dim_q,), jnp.float32)

    # q = k = v (self-attention), so the fused 3-output QKV projection is taken.
    fwd_axial = jax.jit(lambda p, xx: multi_head_attention(
        p, xx, xx, xx, shape=shape, n_head=n_head, attn_type="axial",
        axial_dim=-2))
    fwd_full = jax.jit(lambda p, xx: multi_head_attention(
        p, xx, xx, xx, shape=shape, n_head=n_head, attn_type="full",
        causal=False))
    fwd_causal = jax.jit(lambda p, xx: multi_head_attention(
        p, xx, xx, xx, shape=shape, n_head=n_head, attn_type="full",
        causal=True))

    out_axial = jax.block_until_ready(fwd_axial(params, x))
    out_full = jax.block_until_ready(fwd_full(params, x))
    out_causal = jax.block_until_ready(fwd_causal(params, x))

    ref_axial = mha_reference(params, x, x, x, shape=shape, n_head=n_head,
                              attn_type="axial", axial_dim=-2)
    ref_full = mha_reference(params, x, x, x, shape=shape, n_head=n_head,
                             attn_type="full", causal=False)
    ref_causal = mha_reference(params, x, x, x, shape=shape, n_head=n_head,
                               attn_type="full", causal=True)

    def rel_err(a, b):
        return float(jnp.linalg.norm((a - b).ravel()) /
                     (jnp.linalg.norm(b.ravel()) + 1e-12))

    expected = (B,) + shape + (dim_q,)
    for name, out, ref in (("axial", out_axial, ref_axial),
                           ("full", out_full, ref_full),
                           ("causal", out_causal, ref_causal)):
        assert out.shape == expected, (name, out.shape)
        assert bool(jnp.all(jnp.isfinite(out))), name
        err = rel_err(out, ref)
        # bf16 MXU + bf16 intermediates + approx reciprocal tolerance
        assert err < 5e-2, (name, err)
    print("KERNEL_OK")
</pallas_src>

<mosaic_0001>
module attributes {stable_mosaic.version = 11 : i64} {
  func.func @_fused_linear_kernel(%arg0: i32, %arg1: memref<64x32xf32, #tpu.memory_space<vmem>>, %arg2: memref<32x96xf32, #tpu.memory_space<vmem>>, %arg3: memref<1x96xf32, #tpu.memory_space<vmem>>, %arg4: memref<64x32xbf16, #tpu.memory_space<vmem>>, %arg5: memref<64x32xbf16, #tpu.memory_space<vmem>>, %arg6: memref<64x32xbf16, #tpu.memory_space<vmem>>) attributes {dimension_semantics = [#tpu.dimension_semantics<parallel>], iteration_bounds = array<i64: 2>, scalar_prefetch = 0 : i64, scratch_operands = 0 : i64, tpu.core_type = #tpu.core_type<tc>, window_params = [{transform_indices = @transform_0, window_bounds = array<i64: 64, 32>}, {pipeline_mode = #tpu.pipeline_mode<synchronous>, transform_indices = @transform_1, window_bounds = array<i64: 32, 96>}, {pipeline_mode = #tpu.pipeline_mode<synchronous>, transform_indices = @transform_2, window_bounds = array<i64: 1, 96>}, {transform_indices = @transform_3, window_bounds = array<i64: 64, 32>}, {transform_indices = @transform_4, window_bounds = array<i64: 64, 32>}, {transform_indices = @transform_5, window_bounds = array<i64: 64, 32>}]} {
    %c0 = arith.constant 0 : index
    %c0_0 = arith.constant 0 : index
    %0 = vector.load %arg1[%c0, %c0_0] : memref<64x32xf32, #tpu.memory_space<vmem>>, vector<64x32xf32>
    %1 = arith.truncf %0 : vector<64x32xf32> to vector<64x32xbf16>
    %c0_1 = arith.constant 0 : index
    %c0_2 = arith.constant 0 : index
    %2 = vector.load %arg2[%c0_1, %c0_2] : memref<32x96xf32, #tpu.memory_space<vmem>>, vector<32x96xf32>
    %3 = arith.truncf %2 : vector<32x96xf32> to vector<32x96xbf16>
    %cst = arith.constant dense<0.000000e+00> : vector<64x96xf32>
    %4 = tpu.matmul %1, %3, %cst {dimension_numbers = #tpu.dot_dimension_numbers<[1], [0], [0], [1], [0, 0, 1, 1], [], []>} : vector<64x32xbf16>, vector<32x96xbf16>, vector<64x96xf32> -> vector<64x96xf32>
    %c0_3 = arith.constant 0 : index
    %c0_4 = arith.constant 0 : index
    %5 = vector.load %arg3[%c0_3, %c0_4] : memref<1x96xf32, #tpu.memory_space<vmem>>, vector<1x96xf32>
    %6 = vector.broadcast %5 : vector<1x96xf32> to vector<64x96xf32>
    %7 = arith.addf %4, %6 : vector<64x96xf32>
    %8 = vector.extract_strided_slice %7 {offsets = [0, 0], sizes = [64, 32], strides = [1, 1]} : vector<64x96xf32> to vector<64x32xf32>
    %9 = arith.truncf %8 : vector<64x32xf32> to vector<64x32xbf16>
    %c0_5 = arith.constant 0 : index
    %c0_6 = arith.constant 0 : index
    %10 = vector.load %arg4[%c0_5, %c0_6] : memref<64x32xbf16, #tpu.memory_space<vmem>>, vector<64x32xbf16>
    tpu.vector_store %arg4[%c0_5, %c0_6], %9 {strides = array<i32>} : memref<64x32xbf16, #tpu.memory_space<vmem>>, vector<64x32xbf16>,
    %11 = vector.extract_strided_slice %7 {offsets = [0, 32], sizes = [64, 32], strides = [1, 1]} : vector<64x96xf32> to vector<64x32xf32>
    %12 = arith.truncf %11 : vector<64x32xf32> to vector<64x32xbf16>
    %c0_7 = arith.constant 0 : index
    %c0_8 = arith.constant 0 : index
    %13 = vector.load %arg5[%c0_7, %c0_8] : memref<64x32xbf16, #tpu.memory_space<vmem>>, vector<64x32xbf16>
    tpu.vector_store %arg5[%c0_7, %c0_8], %12 {strides = array<i32>} : memref<64x32xbf16, #tpu.memory_space<vmem>>, vector<64x32xbf16>,
    %14 = vector.extract_strided_slice %7 {offsets = [0, 64], sizes = [64, 32], strides = [1, 1]} : vector<64x96xf32> to vector<64x32xf32>
    %15 = arith.truncf %14 : vector<64x32xf32> to vector<64x32xbf16>
    %c0_9 = arith.constant 0 : index
    %c0_10 = arith.constant 0 : index
    %16 = vector.load %arg6[%c0_9, %c0_10] : memref<64x32xbf16, #tpu.memory_space<vmem>>, vector<64x32xbf16>
    tpu.vector_store %arg6[%c0_9, %c0_10], %15 {strides = array<i32>} : memref<64x32xbf16, #tpu.memory_space<vmem>>, vector<64x32xbf16>,
    return
  }
  func.func @transform_0(%arg0: i32) -> (i32, i32) {
    %c0_i32 = arith.constant 0 : i32
    %c0_i32_0 = arith.constant 0 : i32
    return %arg0, %c0_i32 : i32, i32
  }
  func.func @transform_1(%arg0: i32) -> (i32, i32) {
    %c0_i32 = arith.constant 0 : i32
    %c0_i32_0 = arith.constant 0 : i32
    %c0_i32_1 = arith.constant 0 : i32
    return %c0_i32, %c0_i32_0 : i32, i32
  }
  func.func @transform_2(%arg0: i32) -> (i32, i32) {
    %c0_i32 = arith.constant 0 : i32
    %c0_i32_0 = arith.constant 0 : i32
    %c0_i32_1 = arith.constant 0 : i32
    return %c0_i32, %c0_i32_0 : i32, i32
  }
  func.func @transform_3(%arg0: i32) -> (i32, i32) {
    %c0_i32 = arith.constant 0 : i32
    %c0_i32_0 = arith.constant 0 : i32
    return %arg0, %c0_i32 : i32, i32
  }
  func.func @transform_4(%arg0: i32) -> (i32, i32) {
    %c0_i32 = arith.constant 0 : i32
    %c0_i32_0 = arith.constant 0 : i32
    return %arg0, %c0_i32 : i32, i32
  }
  func.func @transform_5(%arg0: i32) -> (i32, i32) {
    %c0_i32 = arith.constant 0 : i32
    %c0_i32_0 = arith.constant 0 : i32
    return %arg0, %c0_i32 : i32, i32
  }
}

module attributes {stable_mosaic.version = 11 : i64} {
  func.func @_fused_linear_kernel(%arg0: i32, %arg1: memref<64x32xbf16, #tpu.memory_space<vmem>>, %arg2: memref<32x32xf32, #tpu.memory_space<vmem>>, %arg3: memref<1x32xf32, #tpu.memory_space<vmem>>, %arg4: memref<64x32xf32, #tpu.memory_space<vmem>>) attributes {dimension_semantics = [#tpu.dimension_semantics<parallel>], iteration_bounds = array<i64: 2>, scalar_prefetch = 0 : i64, scratch_operands = 0 : i64, tpu.core_type = #tpu.core_type<tc>, window_params = [{transform_indices = @transform_0, window_bounds = array<i64: 64, 32>}, {pipeline_mode = #tpu.pipeline_mode<synchronous>, transform_indices = @transform_1, window_bounds = array<i64: 32, 32>}, {pipeline_mode = #tpu.pipeline_mode<synchronous>, transform_indices = @transform_2, window_bounds = array<i64: 1, 32>}, {transform_indices = @transform_3, window_bounds = array<i64: 64, 32>}]} {
    %c0 = arith.constant 0 : index
    %c0_0 = arith.constant 0 : index
    %0 = vector.load %arg1[%c0, %c0_0] : memref<64x32xbf16, #tpu.memory_space<vmem>>, vector<64x32xbf16>
    %c0_1 = arith.constant 0 : index
    %c0_2 = arith.constant 0 : index
    %1 = vector.load %arg2[%c0_1, %c0_2] : memref<32x32xf32, #tpu.memory_space<vmem>>, vector<32x32xf32>
    %2 = arith.truncf %1 : vector<32x32xf32> to vector<32x32xbf16>
    %cst = arith.constant dense<0.000000e+00> : vector<64x32xf32>
    %3 = tpu.matmul %0, %2, %cst {dimension_numbers = #tpu.dot_dimension_numbers<[1], [0], [0], [1], [0, 0, 1, 1], [], []>} : vector<64x32xbf16>, vector<32x32xbf16>, vector<64x32xf32> -> vector<64x32xf32>
    %c0_3 = arith.constant 0 : index
    %c0_4 = arith.constant 0 : index
    %4 = vector.load %arg3[%c0_3, %c0_4] : memref<1x32xf32, #tpu.memory_space<vmem>>, vector<1x32xf32>
    %5 = vector.broadcast %4 : vector<1x32xf32> to vector<64x32xf32>
    %6 = arith.addf %3, %5 : vector<64x32xf32>
    %c0_5 = arith.constant 0 : index
    %c0_6 = arith.constant 0 : index
    %7 = vector.load %arg4[%c0_5, %c0_6] : memref<64x32xf32, #tpu.memory_space<vmem>>, vector<64x32xf32>
    tpu.vector_store %arg4[%c0_5, %c0_6], %6 {strides = array<i32>} : memref<64x32xf32, #tpu.memory_space<vmem>>, vector<64x32xf32>,
    return
  }
  func.func @transform_0(%arg0: i32) -> (i32, i32) {
    %c0_i32 = arith.constant 0 : i32
    %c0_i32_0 = arith.constant 0 : i32
    return %arg0, %c0_i32 : i32, i32
  }
  func.func @transform_1(%arg0: i32) -> (i32, i32) {
    %c0_i32 = arith.constant 0 : i32
    %c0_i32_0 = arith.constant 0 : i32
    %c0_i32_1 = arith.constant 0 : i32
    return %c0_i32, %c0_i32_0 : i32, i32
  }
  func.func @transform_2(%arg0: i32) -> (i32, i32) {
    %c0_i32 = arith.constant 0 : i32
    %c0_i32_0 = arith.constant 0 : i32
    %c0_i32_1 = arith.constant 0 : i32
    return %c0_i32, %c0_i32_0 : i32, i32
  }
  func.func @transform_3(%arg0: i32) -> (i32, i32) {
    %c0_i32 = arith.constant 0 : i32
    %c0_i32_0 = arith.constant 0 : i32
    return %arg0, %c0_i32 : i32, i32
  }
}

module attributes {stable_mosaic.version = 11 : i64} {
  func.func @_packed_attention_kernel(%arg0: i32, %arg1: memref<8x8x32xbf16, #tpu.memory_space<vmem>>, %arg2: memref<8x8x32xbf16, #tpu.memory_space<vmem>>, %arg3: memref<8x8x32xbf16, #tpu.memory_space<vmem>>, %arg4: memref<8x8x32xbf16, #tpu.memory_space<vmem>>) attributes {dimension_semantics = [#tpu.dimension_semantics<parallel>], iteration_bounds = array<i64: 2>, scalar_prefetch = 0 : i64, scratch_operands = 0 : i64, tpu.core_type = #tpu.core_type<tc>, window_params = [{transform_indices = @transform_0, window_bounds = array<i64: 8, 8, 32>}, {transform_indices = @transform_1, window_bounds = array<i64: 8, 8, 32>}, {transform_indices = @transform_2, window_bounds = array<i64: 8, 8, 32>}, {transform_indices = @transform_3, window_bounds = array<i64: 8, 8, 32>}]} {
    %c0 = arith.constant 0 : index
    %c0_0 = arith.constant 0 : index
    %c0_1 = arith.constant 0 : index
    %0 = vector.load %arg1[%c0, %c0_0, %c0_1] : memref<8x8x32xbf16, #tpu.memory_space<vmem>>, vector<8x8x32xbf16>
    %c0_2 = arith.constant 0 : index
    %c0_3 = arith.constant 0 : index
    %c0_4 = arith.constant 0 : index
    %1 = vector.load %arg2[%c0_2, %c0_3, %c0_4] : memref<8x8x32xbf16, #tpu.memory_space<vmem>>, vector<8x8x32xbf16>
    %c0_5 = arith.constant 0 : index
    %c0_6 = arith.constant 0 : index
    %c0_7 = arith.constant 0 : index
    %2 = vector.load %arg3[%c0_5, %c0_6, %c0_7] : memref<8x8x32xbf16, #tpu.memory_space<vmem>>, vector<8x8x32xbf16>
    %3 = vector.extract_strided_slice %0 {offsets = [0, 0, 0], sizes = [8, 8, 8], strides = [1, 1, 1]} : vector<8x8x32xbf16> to vector<8x8x8xbf16>
    %4 = vector.extract_strided_slice %0 {offsets = [0, 0, 8], sizes = [8, 8, 8], strides = [1, 1, 1]} : vector<8x8x32xbf16> to vector<8x8x8xbf16>
    %5 = vector.extract_strided_slice %0 {offsets = [0, 0, 16], sizes = [8, 8, 8], strides = [1, 1, 1]} : vector<8x8x32xbf16> to vector<8x8x8xbf16>
    %6 = vector.extract_strided_slice %0 {offsets = [0, 0, 24], sizes = [8, 8, 8], strides = [1, 1, 1]} : vector<8x8x32xbf16> to vector<8x8x8xbf16>
    %7 = tpu.concatenate %3, %4, %5, %6 in 0 : vector<8x8x8xbf16>, vector<8x8x8xbf16>, vector<8x8x8xbf16>, vector<8x8x8xbf16> -> vector<32x8x8xbf16>
    %8 = vector.extract_strided_slice %1 {offsets = [0, 0, 0], sizes = [8, 8, 8], strides = [1, 1, 1]} : vector<8x8x32xbf16> to vector<8x8x8xbf16>
    %9 = vector.extract_strided_slice %1 {offsets = [0, 0, 8], sizes = [8, 8, 8], strides = [1, 1, 1]} : vector<8x8x32xbf16> to vector<8x8x8xbf16>
    %10 = vector.extract_strided_slice %1 {offsets = [0, 0, 16], sizes = [8, 8, 8], strides = [1, 1, 1]} : vector<8x8x32xbf16> to vector<8x8x8xbf16>
    %11 = vector.extract_strided_slice %1 {offsets = [0, 0, 24], sizes = [8, 8, 8], strides = [1, 1, 1]} : vector<8x8x32xbf16> to vector<8x8x8xbf16>
    %12 = tpu.concatenate %8, %9, %10, %11 in 0 : vector<8x8x8xbf16>, vector<8x8x8xbf16>, vector<8x8x8xbf16>, vector<8x8x8xbf16> -> vector<32x8x8xbf16>
    %13 = vector.extract_strided_slice %2 {offsets = [0, 0, 0], sizes = [8, 8, 8], strides = [1, 1, 1]} : vector<8x8x32xbf16> to vector<8x8x8xbf16>
    %14 = vector.extract_strided_slice %2 {offsets = [0, 0, 8], sizes = [8, 8, 8], strides = [1, 1, 1]} : vector<8x8x32xbf16> to vector<8x8x8xbf16>
    %15 = vector.extract_strided_slice %2 {offsets = [0, 0, 16], sizes = [8, 8, 8], strides = [1, 1, 1]} : vector<8x8x32xbf16> to vector<8x8x8xbf16>
    %16 = vector.extract_strided_slice %2 {offsets = [0, 0, 24], sizes = [8, 8, 8], strides = [1, 1, 1]} : vector<8x8x32xbf16> to vector<8x8x8xbf16>
    %17 = tpu.concatenate %13, %14, %15, %16 in 0 : vector<8x8x8xbf16>, vector<8x8x8xbf16>, vector<8x8x8xbf16>, vector<8x8x8xbf16> -> vector<32x8x8xbf16>
    "tpu.trace_start"() <{level = 10 : i32, message = "bld,bmd->blm"}> : () -> ()
    %cst = arith.constant dense<0.000000e+00> : vector<32x8x8xf32>
    %18 = tpu.matmul %7, %12, %cst {dimension_numbers = #tpu.dot_dimension_numbers<[2], [2], [1], [1], [0, 0, 0, 1, 1, 1], [0], [0]>} : vector<32x8x8xbf16>, vector<32x8x8xbf16>, vector<32x8x8xf32> -> vector<32x8x8xf32>
    "tpu.trace_stop"() : () -> ()
    %cst_8 = arith.constant dense<0xFF800000> : vector<32x8xf32>
    %19 = vector.multi_reduction <maximumf>, %18, %cst_8 [2] : vector<32x8x8xf32> to vector<32x8xf32>
    %20 = vector.shape_cast %19 : vector<32x8xf32> to vector<32x8x1xf32>
    %21 = vector.broadcast %20 : vector<32x8x1xf32> to vector<32x8x8xf32>
    %22 = arith.subf %18, %21 : vector<32x8x8xf32>
    %23 = math.exp %22 : vector<32x8x8xf32>
    %cst_9 = arith.constant dense<0.000000e+00> : vector<32x8xf32>
    %24 = vector.multi_reduction <add>, %23, %cst_9 [2] : vector<32x8x8xf32> to vector<32x8xf32>
    %25 = vector.shape_cast %24 : vector<32x8xf32> to vector<32x8x1xf32>
    %26 = tpu.reciprocal %25 {approx = true} : vector<32x8x1xf32> -> vector<32x8x1xf32>
    %27 = vector.broadcast %26 : vector<32x8x1xf32> to vector<32x8x8xf32>
    %28 = arith.mulf %23, %27 : vector<32x8x8xf32>
    %29 = arith.truncf %28 : vector<32x8x8xf32> to vector<32x8x8xbf16>
    "tpu.trace_start"() <{level = 10 : i32, message = "blm,bmd->bld"}> : () -> ()
    %cst_10 = arith.constant dense<0.000000e+00> : vector<32x8x8xf32>
    %30 = tpu.matmul %29, %17, %cst_10 {dimension_numbers = #tpu.dot_dimension_numbers<[2], [1], [1], [2], [0, 0, 0, 1, 1, 2], [0], [0]>} : vector<32x8x8xbf16>, vector<32x8x8xbf16>, vector<32x8x8xf32> -> vector<32x8x8xf32>
    "tpu.trace_stop"() : () -> ()
    %31 = vector.extract_strided_slice %30 {offsets = [0, 0, 0], sizes = [8, 8, 8], strides = [1, 1, 1]} : vector<32x8x8xf32> to vector<8x8x8xf32>
    %32 = vector.extract_strided_slice %30 {offsets = [8, 0, 0], sizes = [8, 8, 8], strides = [1, 1, 1]} : vector<32x8x8xf32> to vector<8x8x8xf32>
    %33 = vector.extract_strided_slice %30 {offsets = [16, 0, 0], sizes = [8, 8, 8], strides = [1, 1, 1]} : vector<32x8x8xf32> to vector<8x8x8xf32>
    %34 = vector.extract_strided_slice %30 {offsets = [24, 0, 0], sizes = [8, 8, 8], strides = [1, 1, 1]} : vector<32x8x8xf32> to vector<8x8x8xf32>
    %35 = tpu.concatenate %31, %32, %33, %34 in 2 : vector<8x8x8xf32>, vector<8x8x8xf32>, vector<8x8x8xf32>, vector<8x8x8xf32> -> vector<8x8x32xf32>
    %36 = arith.truncf %35 : vector<8x8x32xf32> to vector<8x8x32xbf16>
    %c0_11 = arith.constant 0 : index
    %c0_12 = arith.constant 0 : index
    %c0_13 = arith.constant 0 : index
    %37 = vector.load %arg4[%c0_11, %c0_12, %c0_13] : memref<8x8x32xbf16, #tpu.memory_space<vmem>>, vector<8x8x32xbf16>
    tpu.vector_store %arg4[%c0_11, %c0_12, %c0_13], %36 {strides = array<i32>} : memref<8x8x32xbf16, #tpu.memory_space<vmem>>, vector<8x8x32xbf16>,
    return
  }
  func.func @transform_0(%arg0: i32) -> (i32, i32, i32) {
    %c0_i32 = arith.constant 0 : i32
    %c0_i32_0 = arith.constant 0 : i32
    %c0_i32_1 = arith.constant 0 : i32
    return %arg0, %c0_i32, %c0_i32_0 : i32, i32, i32
  }
  func.func @transform_1(%arg0: i32) -> (i32, i32, i32) {
    %c0_i32 = arith.constant 0 : i32
    %c0_i32_0 = arith.constant 0 : i32
    %c0_i32_1 = arith.constant 0 : i32
    return %arg0, %c0_i32, %c0_i32_0 : i32, i32, i32
  }
  func.func @transform_2(%arg0: i32) -> (i32, i32, i32) {
    %c0_i32 = arith.constant 0 : i32
    %c0_i32_0 = arith.constant 0 : i32
    %c0_i32_1 = arith.constant 0 : i32
    return %arg0, %c0_i32, %c0_i32_0 : i32, i32, i32
  }
  func.func @transform_3(%arg0: i32) -> (i32, i32, i32) {
    %c0_i32 = arith.constant 0 : i32
    %c0_i32_0 = arith.constant 0 : i32
    %c0_i32_1 = arith.constant 0 : i32
    return %arg0, %c0_i32, %c0_i32_0 : i32, i32, i32
  }
}

</mosaic_0001>

<llo_original>
// kernel: _lambda_.5
$region0: #{_lambda_.5}
  #allocation0 [shape = 'u32[]', space=smem, size = 0x4, offset = 0x4, fixed_abs, tag = 'smem constant byte address 0x4 - core index']
  #allocation1 [shape = 'u32[72,128]{1,0:T(1,128)}', space=vmem, size = 0x9000, scoped, tag = 'internal scratch']
  %s0 = inlined_call_operand.vmem [shape: bf16[128,32], index: 0, kind: input, shape index: {}]
  %s1 = inlined_call_operand.hbm [shape: f32[32,32], index: 1, kind: input, shape index: {}]
  %s2 = inlined_call_operand.vmem [shape: f32[1,32], index: 2, kind: input, shape index: {}]
  %s3 = inlined_call_operand.hbm [shape: f32[128,32], index: 3, kind: output, shape index: {}]
  %s4 = sld [smem:[#allocation0]]
  $region49: #{_lambda_.5} parent=0
    _
  %s6 = ssub.s32 1, %s4
  %s7 = scalar_select 0, %s6, %s4
  $region1: #{_lambda_.5} parent=0
    #allocation2 [shape = 'u8[16384]{0}', space=vmem, size = 0x4000, scoped, tag = 'input window, operand 1, single buffered']
    #allocation3 [shape = 's32[2]{0}', space=sflag, size = 0x8, scoped, tag = 'scoped memory for _lambda_.5']
    #allocation4 [shape = 's32[2]{0}', space=sflag, size = 0x8, scoped, tag = 'scoped memory for _lambda_.5']
    #allocation5 [shape = 'u8[65536]{0}', space=vmem, size = 0x10000, scoped, tag = 'output window, operand 0']
    %8 = vsyncpa [#allocation3], 0
    %9 = vsyncpa [#allocation4], 0
    %s10 = scalar_lea.sflag [#allocation4], 1
    %11 = vsyncpa %s10, 0
    loop: start=0, step=1, limit=4
    $region2: #{_lambda_.5} parent=1 // loop_pre_header
      _
    $region3: #{_lambda_.5} parent=1 // loop_header
      %s13 = sphi 0, %s17
      %p14 = scmp.ge.s32.totalorder %s13, 4
      %s23 = sphi 0, %s25
      %s26 = sphi 0, %s23
      %s27 = sphi 0, %s26
      %s43 = sphi 0, %s27
      %s47 = sphi 0, %s47
      %s49 = sphi 0, %s47
      %s50 = sphi 0, %s49
      %s64 = sphi 0, %s50
      %s68 = sphi 0, %s68
      %s70 = sphi 0, %s68
      %s71 = sphi 0, %s70
      %s85 = sphi 0, %s71
      %s91 = sphi 0, %s93
      %s94 = sphi 0, %s91
      %s95 = sphi 0, %s94
      %s111 = sphi 0, %s95
    $region4: #{_lambda_.5} parent=1 // loop_header_branch
      %16 = sbr.rel (%p14) target = $region8
    $region5: #{_lambda_.5} parent=1 // loop_body
      %s18 = ssub.s32 %s13, 1
      %s19 = ssub.s32 %s13, 2
      %s20 = sadd.s32 %s13, 1
      %s21 = ssub.s32 %s13, %s20
      %p22 = scmp.eq.s32.totalorder %s21, 0
      %s24 = sadd.s32 %s23, 1
      %s25 = scalar_select %p22, %s23, %s24
      %p28 = pneg %p22
      %p29 = scmp.eq.s32.totalorder %s13, 1
      %p30 = por %p28, %p29
      %p31 = scmp.ne.s32.totalorder %s23, %s26
      %p32 = scmp.eq.s32.totalorder %s13, 0
      %p33 = por %p31, %p32
      %p34 = scmp.ne.s32.totalorder %s23, %s26
      %p35 = scmp.eq.s32.totalorder %s18, 1
      %p36 = por %p34, %p35
      %p37 = scmp.ne.s32.totalorder %s26, %s27
      %p38 = scmp.eq.s32.totalorder %s18, 0
      %p39 = por %p37, %p38
      %p40 = scmp.ne.s32.totalorder %s26, %s27
      %p41 = scmp.eq.s32.totalorder %s19, 1
      %p42 = por %p40, %p41
      %p44 = scmp.ne.s32.totalorder %s27, %s43
      %p45 = scmp.eq.s32.totalorder %s19, 0
      %p46 = por %p44, %p45
      %s48 = sadd.s32 %s47, 1
      %p51 = scmp.eq.s32.totalorder %s13, 1
      %p52 = scmp.ne.s32.totalorder %s47, %s49
      %p53 = scmp.eq.s32.totalorder %s13, 0
      %p54 = por %p52, %p53
      %p55 = scmp.ne.s32.totalorder %s47, %s49
      %p56 = scmp.eq.s32.totalorder %s18, 1
      %p57 = por %p55, %p56
      %p58 = scmp.ne.s32.totalorder %s49, %s50
      %p59 = scmp.eq.s32.totalorder %s18, 0
      %p60 = por %p58, %p59
      %p61 = scmp.ne.s32.totalorder %s49, %s50
      %p62 = scmp.eq.s32.totalorder %s19, 1
      %p63 = por %p61, %p62
      %p65 = scmp.ne.s32.totalorder %s50, %s64
      %p66 = scmp.eq.s32.totalorder %s19, 0
      %p67 = por %p65, %p66
      %s69 = sadd.s32 %s68, 1
      %p72 = scmp.eq.s32.totalorder %s13, 1
      %p73 = scmp.ne.s32.totalorder %s68, %s70
      %p74 = scmp.eq.s32.totalorder %s13, 0
      %p75 = por %p73, %p74
      %p76 = scmp.ne.s32.totalorder %s68, %s70
      %p77 = scmp.eq.s32.totalorder %s18, 1
      %p78 = por %p76, %p77
      %p79 = scmp.ne.s32.totalorder %s70, %s71
      %p80 = scmp.eq.s32.totalorder %s18, 0
      %p81 = por %p79, %p80
      %p82 = scmp.ne.s32.totalorder %s70, %s71
      %p83 = scmp.eq.s32.totalorder %s19, 1
      %p84 = por %p82, %p83
      %p86 = scmp.ne.s32.totalorder %s71, %s85
      %p87 = scmp.eq.s32.totalorder %s19, 0
      %p88 = por %p86, %p87
      %s89 = ssub.s32 %s13, %s20
      %p90 = scmp.eq.s32.totalorder %s89, 0
      %s92 = sadd.s32 %s91, 1
      %s93 = scalar_select %p90, %s91, %s92
      %p96 = pneg %p90
      %p97 = scmp.eq.s32.totalorder %s13, 1
      %p98 = por %p96, %p97
      %p99 = scmp.ne.s32.totalorder %s91, %s94
      %p100 = scmp.eq.s32.totalorder %s13, 0
      %p101 = por %p99, %p100
      %p102 = scmp.ne.s32.totalorder %s91, %s94
      %p103 = scmp.eq.s32.totalorder %s18, 1
      %p104 = por %p102, %p103
      %p105 = scmp.ne.s32.totalorder %s94, %s95
      %p106 = scmp.eq.s32.totalorder %s18, 0
      %p107 = por %p105, %p106
      %p108 = scmp.ne.s32.totalorder %s94, %s95
      %p109 = scmp.eq.s32.totalorder %s19, 1
      %p110 = por %p108, %p109
      %p112 = scmp.ne.s32.totalorder %s95, %s111
      %p113 = scmp.eq.s32.totalorder %s19, 0
      %p114 = por %p112, %p113
      %p115 = scmp.le.s32.totalorder 1, %s13
      %p116 = scmp.lt.s32.totalorder %s13, 3
      %p117 = pnand %p115, %p116
      %p118 = pneg %p117
      // Predicated region
      $region9: #{_lambda_.5} parent=5 // pred_check
        _
      $region10: #{_lambda_.5} parent=5 // pred_check_branch
        %120 = sbr.rel (%p117) target = $region12
      $region11: #{_lambda_.5} parent=5 // pred_region
        %s121 = ssub.s32 %s13, 1
        // Predicated region
        $region13: #{_lambda_.5} parent=11 // pred_check
          %p122 = pneg %p60
        $region14: #{_lambda_.5} parent=11 // pred_check_branch
          %124 = sbr.rel (%p122) target = $region16
        $region15: #{_lambda_.5} parent=11 // pred_region
          %126 = vsyncadd [#allocation3], 0
          %s127 = sshll.u32 %s1, 4
          %s128 = int_to_ptr.hbm [resolvable:$true] %s127
          %s129 = sshll.u32 [#allocation2], 4
          %s130 = int_to_ptr.vmem [resolvable:$true] %s129
          %135 = dma.hbm_to_vmem [thread:$0]  %s128, 512, %s130, [#allocation3], 128, 128, 8
        $region16: #{_lambda_.5} parent=11 // pred_fallthru
          _
        // Predicated region
        $region17: #{_lambda_.5} parent=11 // pred_check
          %p136 = pneg %p81
        $region18: #{_lambda_.5} parent=11 // pred_check_branch
          %138 = sbr.rel (%p136) target = $region20
        $region19: #{_lambda_.5} parent=11 // pred_region
          _
        $region20: #{_lambda_.5} parent=11 // pred_fallthru
          _
      $region12: #{_lambda_.5} parent=5 // pred_fallthru
        _
      %p139 = scmp.lt.s32.totalorder %s13, 2
      // Predicated region
      $region21: #{_lambda_.5} parent=5 // pred_check
        %p140 = pneg %p139
      $region22: #{_lambda_.5} parent=5 // pred_check_branch
        %142 = sbr.rel (%p140) target = $region24
      $region23: #{_lambda_.5} parent=5 // pred_region
        // Predicated region
        $region25: #{_lambda_.5} parent=23 // pred_check
          %p143 = pneg %p33
        $region26: #{_lambda_.5} parent=23 // pred_check_branch
          %145 = sbr.rel (%p143) target = $region28
        $region27: #{_lambda_.5} parent=23 // pred_region
          %s146 = smul.u32 8, %s13
          %p147 = scmp.lt.s32.totalorder %s146, 15
          %s148 = scalar_select %p147, %s146, 15
          %s149 = smul.addr %s148, 4
          %s150 = scalar_lea.vmem %s0, %s149
          %s151 = smul.u32 8, %s13
        $region28: #{_lambda_.5} parent=23 // pred_fallthru
          _
      $region24: #{_lambda_.5} parent=5 // pred_fallthru
        _
      %p152 = scmp.le.s32.totalorder 1, %s13
      %p153 = scmp.lt.s32.totalorder %s13, 3
      %p154 = pnand %p152, %p153
      %p155 = pneg %p154
      // Predicated region
      $region29: #{_lambda_.5} parent=5 // pred_check
        _
      $region30: #{_lambda_.5} parent=5 // pred_check_branch
        %157 = sbr.rel (%p154) target = $region32
      $region31: #{_lambda_.5} parent=5 // pred_region
        %s158 = ssub.s32 %s13, 1
        // Predicated region
        $region33: #{_lambda_.5} parent=31 // pred_check
          %p159 = pneg %p60
        $region34: #{_lambda_.5} parent=31 // pred_check_branch
          %161 = sbr.rel (%p159) target = $region36
        $region35: #{_lambda_.5} parent=31 // pred_region
          %163 = dma.done [#allocation3], 512
        $region36: #{_lambda_.5} parent=31 // pred_fallthru
          _
        %s164 = smul.u32 8, %s18
        %p165 = scmp.lt.s32.totalorder %s164, 15
        %s166 = scalar_select %p165, %s164, 15
        %s167 = smul.addr %s166, 4
        %s168 = scalar_lea.vmem %s0, %s167
        %p169 = pneg %p39
        %p170 = pneg %p36
        %p171 = pneg %p60
        %p172 = pneg %p57
        %p173 = pneg %p81
        %p174 = pneg %p78
        %p175 = pneg %p107
        %p176 = pneg %p104
        %s177 = sand.u32 %s94, 1
        %s178 = scalar_lea.sflag [#allocation4], %s177
        %s179 = sand.u32 %s94, 1
        %s180 = smul.addr %s179, 64
        %s181 = scalar_lea.vmem [#allocation5], %s180
        %s182 = smul.u32 8, %s18
        %p183 = scmp.lt.s32.totalorder %s182, 15
        %s184 = scalar_select %p183, %s182, 15
        %s185 = smul.addr %s184, 4
        %s186 = scalar_lea.vmem %s0, %s185
        %s187 = smul.u32 8, %s18
        %s188 = smul.u32 8, %s18
        %v190 = vld [vmem:[%s186] sm:$0xf]
        %v191 = vld [vmem:[%s186 + $0x4] sm:$0xf]
        %v192 = vld [vmem:[%s186 + $0x8] sm:$0xf]
        %v193 = vld [vmem:[%s186 + $0xc] sm:$0xf]
        %v194 = vld [vmem:[%s186 + $0x10] sm:$0xf]
        %v195 = vld [vmem:[%s186 + $0x14] sm:$0xf]
        %v196 = vld [vmem:[%s186 + $0x18] sm:$0xf]
        %v197 = vld [vmem:[%s186 + $0x1c] sm:$0xf]
        %v198 = vld [vmem:[#allocation2] sm:$0xff]
        %v199 = vld [vmem:[#allocation2 + $0x8] sm:$0xff]
        %v200 = vld [vmem:[#allocation2 + $0x10] sm:$0xff]
        %v201 = vld [vmem:[#allocation2 + $0x18] sm:$0xff]
        %v202 = vpack.c.bf16 %v199, %v198
        %v203 = vpack.c.bf16 %v201, %v200
        %v204 = vld [vmem:[%s2] sm:$0x1]
        %v206 = vperm.slane %v204, 0
        %v216 = vunpack.c.l.b16 %v190
        %v217 = vunpack.c.l.b16 %v191
        %v218 = vunpack.c.l.b16 %v192
        %v219 = vunpack.c.l.b16 %v193
        %v220 = vunpack.c.l.b16 %v194
        %v221 = vunpack.c.l.b16 %v195
        %v222 = vunpack.c.l.b16 %v196
        %v223 = vunpack.c.l.b16 %v197
        %v224 = vpack.c.b16 %v217, %v216
        %v225 = vpack.c.b16 %v219, %v218
        %v226 = vpack.c.b16 %v221, %v220
        %v227 = vpack.c.b16 %v223, %v222
        %vm228 = vcmask 261120
        %v230 = vsel %vm228, %v224, 0
        %v233 = vsel %vm228, %v225, 0
        %v236 = vsel %vm228, %v226, 0
        %v239 = vsel %vm228, %v227, 0
        %241 = vmatpush.bf16.msra.mxu0 0
        %242 = vmatpush.bf16.msra.mxu0 0
        %243 = vmatpush.bf16.msra.mxu0 0
        %244 = vmatpush.bf16.msra.mxu0 0
        %245 = vmatpush.bf16.msra.mxu0 0
        %246 = vmatpush.bf16.msra.mxu0 0
        %247 = vmatpush.bf16.msra.mxu0 %v203
        %248 = vmatpush.bf16.msra.mxu0 %v202
        %249 = vmatmul.bf16.gmra.mxu0 %v230
        %v250 = vpop.f32.mrf.mxu0
        %v251 = vadd.f32 %v206, %v250
        %v252 = vpop.f32.mrf.mxu0
        %v253 = vadd.f32 %v206, %v252
        %254 = vmatmul.bf16.gmra.mxu0 %v233
        %v255 = vpop.f32.mrf.mxu0
        %v256 = vadd.f32 %v206, %v255
        %v257 = vpop.f32.mrf.mxu0
        %v258 = vadd.f32 %v206, %v257
        %259 = vmatmul.bf16.gmra.mxu0 %v236
        %v260 = vpop.f32.mrf.mxu0
        %v261 = vadd.f32 %v206, %v260
        %v262 = vpop.f32.mrf.mxu0
        %v263 = vadd.f32 %v206, %v262
        %264 = vmatmul.bf16.gmra.mxu0 %v239
        %v265 = vpop.f32.mrf.mxu0
        %v266 = vadd.f32 %v206, %v265
        %v267 = vpop.f32.mrf.mxu0
        %v268 = vadd.f32 %v206, %v267
        %269 = vdwg.mxu0
        %270 = vst.msk [vmem:[%s181] sm:$0xff] %vm228, %v251
        %271 = vst.msk [vmem:[%s181 + $0x8] sm:$0xff] %vm228, %v253
        %272 = vst.msk [vmem:[%s181 + $0x10] sm:$0xff] %vm228, %v256
        %273 = vst.msk [vmem:[%s181 + $0x18] sm:$0xff] %vm228, %v258
        %274 = vst.msk [vmem:[%s181 + $0x20] sm:$0xff] %vm228, %v261
        %275 = vst.msk [vmem:[%s181 + $0x28] sm:$0xff] %vm228, %v263
        %276 = vst.msk [vmem:[%s181 + $0x30] sm:$0xff] %vm228, %v266
        %277 = vst.msk [vmem:[%s181 + $0x38] sm:$0xff] %vm228, %v268
        %s278 = sand.u32 %s94, 1
        %s279 = scalar_lea.sflag [#allocation4], %s278
        %s280 = sand.u32 %s94, 1
        %s281 = smul.addr %s280, 64
        %s282 = scalar_lea.vmem [#allocation5], %s281
        // Predicated region
        $region37: #{_lambda_.5} parent=31 // pred_check
          %p283 = pneg %p104
        $region38: #{_lambda_.5} parent=31 // pred_check_branch
          %285 = sbr.rel (%p283) target = $region40
        $region39: #{_lambda_.5} parent=31 // pred_region
          %s286 = smul.u32 8, %s18
          %288 = vsyncadd %s279, 0
          %s289 = smul.addr %s286, 8
          %s290 = scalar_lea.hbm %s3, %s289
          %s291 = sshll.u32 %s282, 4
          %s292 = int_to_ptr.vmem [resolvable:$true] %s291
          %s293 = sshll.u32 %s290, 4
          %s294 = int_to_ptr.hbm [resolvable:$true] %s293
          %299 = dma.vmem_to_hbm [thread:$0]  %s292, 1024, %s294, %s279, 128, 128, 8
        $region40: #{_lambda_.5} parent=31 // pred_fallthru
          _
      $region32: #{_lambda_.5} parent=5 // pred_fallthru
        _
      %p300 = scmp.le.s32.totalorder 2, %s13
      // Predicated region
      $region41: #{_lambda_.5} parent=5 // pred_check
        %p301 = pneg %p300
      $region42: #{_lambda_.5} parent=5 // pred_check_branch
        %303 = sbr.rel (%p301) target = $region44
      $region43: #{_lambda_.5} parent=5 // pred_region
        %s304 = ssub.s32 %s13, 2
        // Predicated region
        $region45: #{_lambda_.5} parent=43 // pred_check
          %p305 = pneg %p110
        $region46: #{_lambda_.5} parent=43 // pred_check_branch
          %307 = sbr.rel (%p305) target = $region48
        $region47: #{_lambda_.5} parent=43 // pred_region
          %s308 = sand.u32 %s95, 1
          %s309 = scalar_lea.sflag [#allocation4], %s308
          %s310 = sand.u32 %s95, 1
          %s311 = smul.addr %s310, 64
          %s312 = scalar_lea.vmem [#allocation5], %s311
          %314 = dma.done %s309, 1024
        $region48: #{_lambda_.5} parent=43 // pred_fallthru
          _
      $region44: #{_lambda_.5} parent=5 // pred_fallthru
        _
    $region6: #{_lambda_.5} parent=1 // loop_footer
      %s17 = sadd.s32 1, %s13
    $region7: #{_lambda_.5} parent=1 // loop_footer_branch
      %12 = sbr.rel target = $region3
    $region8: #{_lambda_.5} parent=1 // loop_exit
      _
    %315 = vsyncpa [#allocation3], 1
    %s316 = scalar_lea.sflag [#allocation3], 1
    %317 = vsyncpa %s316, 1
    %318 = vsyncpa [#allocation4], 1
    %s319 = scalar_lea.sflag [#allocation4], 1
    %320 = vsyncpa %s319, 1

// kernel: _lambda_.3
$region0: #{_lambda_.3}
  #allocation0 [shape = 'u32[]', space=smem, size = 0x4, offset = 0x4, fixed_abs, tag = 'smem constant byte address 0x4 - core index']
  #allocation1 [shape = 'u32[72,128]{1,0:T(1,128)}', space=vmem, size = 0x9000, scoped, tag = 'internal scratch']
  %s0 = inlined_call_operand.vmem [shape: f32[128,32], index: 0, kind: input, shape index: {}]
  %s1 = inlined_call_operand.vmem [shape: f32[32,96], index: 1, kind: input, shape index: {}]
  %s2 = inlined_call_operand.vmem [shape: f32[1,96], index: 2, kind: input, shape index: {}]
  %s3 = inlined_call_operand.vmem [shape: bf16[128,32], index: 3, kind: output, shape index: {0}]
  %s4 = inlined_call_operand.vmem [shape: bf16[128,32], index: 4, kind: output, shape index: {1}]
  %s5 = inlined_call_operand.vmem [shape: bf16[128,32], index: 5, kind: output, shape index: {2}]
  %6 = xla_tuple %s3, %s4, %s5
  %s7 = sld [smem:[#allocation0]]
  $region61: #{_lambda_.3} parent=0
    _
  %s9 = ssub.s32 1, %s7
  %s10 = scalar_select 0, %s9, %s7
  loop: start=0, step=1, limit=4
  $region2: #{_lambda_.3} parent=0 // loop_pre_header
    _
  $region3: #{_lambda_.3} parent=0 // loop_header
    %s12 = sphi 0, %s16
    %p13 = scmp.ge.s32.totalorder %s12, 4
    %s22 = sphi 0, %s24
    %s25 = sphi 0, %s22
    %s26 = sphi 0, %s25
    %s42 = sphi 0, %s26
    %s46 = sphi 0, %s46
    %s48 = sphi 0, %s46
    %s49 = sphi 0, %s48
    %s63 = sphi 0, %s49
    %s67 = sphi 0, %s67
    %s69 = sphi 0, %s67
    %s70 = sphi 0, %s69
    %s84 = sphi 0, %s70
    %s90 = sphi 0, %s92
    %s93 = sphi 0, %s90
    %s94 = sphi 0, %s93
    %s110 = sphi 0, %s94
    %s116 = sphi 0, %s118
    %s119 = sphi 0, %s116
    %s120 = sphi 0, %s119
    %s136 = sphi 0, %s120
    %s142 = sphi 0, %s144
    %s145 = sphi 0, %s142
    %s146 = sphi 0, %s145
    %s162 = sphi 0, %s146
  $region4: #{_lambda_.3} parent=0 // loop_header_branch
    %15 = sbr.rel (%p13) target = $region8
  $region5: #{_lambda_.3} parent=0 // loop_body
    %s17 = ssub.s32 %s12, 1
    %s18 = ssub.s32 %s12, 2
    %s19 = sadd.s32 %s12, 1
    %s20 = ssub.s32 %s12, %s19
    %p21 = scmp.eq.s32.totalorder %s20, 0
    %s23 = sadd.s32 %s22, 1
    %s24 = scalar_select %p21, %s22, %s23
    %p27 = pneg %p21
    %p28 = scmp.eq.s32.totalorder %s12, 1
    %p29 = por %p27, %p28
    %p30 = scmp.ne.s32.totalorder %s22, %s25
    %p31 = scmp.eq.s32.totalorder %s12, 0
    %p32 = por %p30, %p31
    %p33 = scmp.ne.s32.totalorder %s22, %s25
    %p34 = scmp.eq.s32.totalorder %s17, 1
    %p35 = por %p33, %p34
    %p36 = scmp.ne.s32.totalorder %s25, %s26
    %p37 = scmp.eq.s32.totalorder %s17, 0
    %p38 = por %p36, %p37
    %p39 = scmp.ne.s32.totalorder %s25, %s26
    %p40 = scmp.eq.s32.totalorder %s18, 1
    %p41 = por %p39, %p40
    %p43 = scmp.ne.s32.totalorder %s26, %s42
    %p44 = scmp.eq.s32.totalorder %s18, 0
    %p45 = por %p43, %p44
    %s47 = sadd.s32 %s46, 1
    %p50 = scmp.eq.s32.totalorder %s12, 1
    %p51 = scmp.ne.s32.totalorder %s46, %s48
    %p52 = scmp.eq.s32.totalorder %s12, 0
    %p53 = por %p51, %p52
    %p54 = scmp.ne.s32.totalorder %s46, %s48
    %p55 = scmp.eq.s32.totalorder %s17, 1
    %p56 = por %p54, %p55
    %p57 = scmp.ne.s32.totalorder %s48, %s49
    %p58 = scmp.eq.s32.totalorder %s17, 0
    %p59 = por %p57, %p58
    %p60 = scmp.ne.s32.totalorder %s48, %s49
    %p61 = scmp.eq.s32.totalorder %s18, 1
    %p62 = por %p60, %p61
    %p64 = scmp.ne.s32.totalorder %s49, %s63
    %p65 = scmp.eq.s32.totalorder %s18, 0
    %p66 = por %p64, %p65
    %s68 = sadd.s32 %s67, 1
    %p71 = scmp.eq.s32.totalorder %s12, 1
    %p72 = scmp.ne.s32.totalorder %s67, %s69
    %p73 = scmp.eq.s32.totalorder %s12, 0
    %p74 = por %p72, %p73
    %p75 = scmp.ne.s32.totalorder %s67, %s69
    %p76 = scmp.eq.s32.totalorder %s17, 1
    %p77 = por %p75, %p76
    %p78 = scmp.ne.s32.totalorder %s69, %s70
    %p79 = scmp.eq.s32.totalorder %s17, 0
    %p80 = por %p78, %p79
    %p81 = scmp.ne.s32.totalorder %s69, %s70
    %p82 = scmp.eq.s32.totalorder %s18, 1
    %p83 = por %p81, %p82
    %p85 = scmp.ne.s32.totalorder %s70, %s84
    %p86 = scmp.eq.s32.totalorder %s18, 0
    %p87 = por %p85, %p86
    %s88 = ssub.s32 %s12, %s19
    %p89 = scmp.eq.s32.totalorder %s88, 0
    %s91 = sadd.s32 %s90, 1
    %s92 = scalar_select %p89, %s90, %s91
    %p95 = pneg %p89
    %p96 = scmp.eq.s32.totalorder %s12, 1
    %p97 = por %p95, %p96
    %p98 = scmp.ne.s32.totalorder %s90, %s93
    %p99 = scmp.eq.s32.totalorder %s12, 0
    %p100 = por %p98, %p99
    %p101 = scmp.ne.s32.totalorder %s90, %s93
    %p102 = scmp.eq.s32.totalorder %s17, 1
    %p103 = por %p101, %p102
    %p104 = scmp.ne.s32.totalorder %s93, %s94
    %p105 = scmp.eq.s32.totalorder %s17, 0
    %p106 = por %p104, %p105
    %p107 = scmp.ne.s32.totalorder %s93, %s94
    %p108 = scmp.eq.s32.totalorder %s18, 1
    %p109 = por %p107, %p108
    %p111 = scmp.ne.s32.totalorder %s94, %s110
    %p112 = scmp.eq.s32.totalorder %s18, 0
    %p113 = por %p111, %p112
    %s114 = ssub.s32 %s12, %s19
    %p115 = scmp.eq.s32.totalorder %s114, 0
    %s117 = sadd.s32 %s116, 1
    %s118 = scalar_select %p115, %s116, %s117
    %p121 = pneg %p115
    %p122 = scmp.eq.s32.totalorder %s12, 1
    %p123 = por %p121, %p122
    %p124 = scmp.ne.s32.totalorder %s116, %s119
    %p125 = scmp.eq.s32.totalorder %s12, 0
    %p126 = por %p124, %p125
    %p127 = scmp.ne.s32.totalorder %s116, %s119
    %p128 = scmp.eq.s32.totalorder %s17, 1
    %p129 = por %p127, %p128
    %p130 = scmp.ne.s32.totalorder %s119, %s120
    %p131 = scmp.eq.s32.totalorder %s17, 0
    %p132 = por %p130, %p131
    %p133 = scmp.ne.s32.totalorder %s119, %s120
    %p134 = scmp.eq.s32.totalorder %s18, 1
    %p135 = por %p133, %p134
    %p137 = scmp.ne.s32.totalorder %s120, %s136
    %p138 = scmp.eq.s32.totalorder %s18, 0
    %p139 = por %p137, %p138
    %s140 = ssub.s32 %s12, %s19
    %p141 = scmp.eq.s32.totalorder %s140, 0
    %s143 = sadd.s32 %s142, 1
    %s144 = scalar_select %p141, %s142, %s143
    %p147 = pneg %p141
    %p148 = scmp.eq.s32.totalorder %s12, 1
    %p149 = por %p147, %p148
    %p150 = scmp.ne.s32.totalorder %s142, %s145
    %p151 = scmp.eq.s32.totalorder %s12, 0
    %p152 = por %p150, %p151
    %p153 = scmp.ne.s32.totalorder %s142, %s145
    %p154 = scmp.eq.s32.totalorder %s17, 1
    %p155 = por %p153, %p154
    %p156 = scmp.ne.s32.totalorder %s145, %s146
    %p157 = scmp.eq.s32.totalorder %s17, 0
    %p158 = por %p156, %p157
    %p159 = scmp.ne.s32.totalorder %s145, %s146
    %p160 = scmp.eq.s32.totalorder %s18, 1
    %p161 = por %p159, %p160
    %p163 = scmp.ne.s32.totalorder %s146, %s162
    %p164 = scmp.eq.s32.totalorder %s18, 0
    %p165 = por %p163, %p164
    %p166 = scmp.le.s32.totalorder 1, %s12
    %p167 = scmp.lt.s32.totalorder %s12, 3
    %p168 = pnand %p166, %p167
    %p169 = pneg %p168
    // Predicated region
    $region9: #{_lambda_.3} parent=5 // pred_check
      _
    $region10: #{_lambda_.3} parent=5 // pred_check_branch
      %171 = sbr.rel (%p168) target = $region12
    $region11: #{_lambda_.3} parent=5 // pred_region
      %s172 = ssub.s32 %s12, 1
      // Predicated region
      $region13: #{_lambda_.3} parent=11 // pred_check
        %p173 = pneg %p59
      $region14: #{_lambda_.3} parent=11 // pred_check_branch
        %175 = sbr.rel (%p173) target = $region16
      $region15: #{_lambda_.3} parent=11 // pred_region
        _
      $region16: #{_lambda_.3} parent=11 // pred_fallthru
        _
      // Predicated region
      $region17: #{_lambda_.3} parent=11 // pred_check
        %p176 = pneg %p80
      $region18: #{_lambda_.3} parent=11 // pred_check_branch
        %178 = sbr.rel (%p176) target = $region20
      $region19: #{_lambda_.3} parent=11 // pred_region
        _
      $region20: #{_lambda_.3} parent=11 // pred_fallthru
        _
    $region12: #{_lambda_.3} parent=5 // pred_fallthru
      _
    %p179 = scmp.lt.s32.totalorder %s12, 2
    // Predicated region
    $region21: #{_lambda_.3} parent=5 // pred_check
      %p180 = pneg %p179
    $region22: #{_lambda_.3} parent=5 // pred_check_branch
      %182 = sbr.rel (%p180) target = $region24
    $region23: #{_lambda_.3} parent=5 // pred_region
      // Predicated region
      $region25: #{_lambda_.3} parent=23 // pred_check
        %p183 = pneg %p32
      $region26: #{_lambda_.3} parent=23 // pred_check_branch
        %185 = sbr.rel (%p183) target = $region28
      $region27: #{_lambda_.3} parent=23 // pred_region
        %s186 = smul.u32 8, %s12
        %p187 = scmp.lt.s32.totalorder %s186, 15
        %s188 = scalar_select %p187, %s186, 15
        %s189 = smul.addr %s188, 8
        %s190 = scalar_lea.vmem %s0, %s189
        %s191 = smul.u32 8, %s12
      $region28: #{_lambda_.3} parent=23 // pred_fallthru
        _
    $region24: #{_lambda_.3} parent=5 // pred_fallthru
      _
    %p192 = scmp.le.s32.totalorder 1, %s12
    %p193 = scmp.lt.s32.totalorder %s12, 3
    %p194 = pnand %p192, %p193
    %p195 = pneg %p194
    // Predicated region
    $region29: #{_lambda_.3} parent=5 // pred_check
      _
    $region30: #{_lambda_.3} parent=5 // pred_check_branch
      %197 = sbr.rel (%p194) target = $region32
    $region31: #{_lambda_.3} parent=5 // pred_region
      %s198 = ssub.s32 %s12, 1
      %s199 = smul.u32 8, %s17
      %p200 = scmp.lt.s32.totalorder %s199, 15
      %s201 = scalar_select %p200, %s199, 15
      %s202 = smul.addr %s201, 8
      %s203 = scalar_lea.vmem %s0, %s202
      %p204 = pneg %p38
      %p205 = pneg %p35
      %p206 = pneg %p59
      %p207 = pneg %p56
      %p208 = pneg %p80
      %p209 = pneg %p77
      %p210 = pneg %p106
      %p211 = pneg %p103
      %s212 = smul.u32 8, %s17
      %p213 = scmp.lt.s32.totalorder %s212, 15
      %s214 = scalar_select %p213, %s212, 15
      %s215 = smul.addr %s214, 4
      %s216 = scalar_lea.vmem %s3, %s215
      %p217 = pneg %p132
      %p218 = pneg %p129
      %s219 = smul.u32 8, %s17
      %p220 = scmp.lt.s32.totalorder %s219, 15
      %s221 = scalar_select %p220, %s219, 15
      %s222 = smul.addr %s221, 4
      %s223 = scalar_lea.vmem %s4, %s222
      %p224 = pneg %p158
      %p225 = pneg %p155
      %s226 = smul.u32 8, %s17
      %p227 = scmp.lt.s32.totalorder %s226, 15
      %s228 = scalar_select %p227, %s226, 15
      %s229 = smul.addr %s228, 4
      %s230 = scalar_lea.vmem %s5, %s229
      %s231 = smul.u32 8, %s17
      %p232 = scmp.lt.s32.totalorder %s231, 15
      %s233 = scalar_select %p232, %s231, 15
      %s234 = smul.addr %s233, 8
      %s235 = scalar_lea.vmem %s0, %s234
      %s236 = smul.u32 8, %s17
      %s237 = smul.u32 8, %s17
      %p238 = scmp.lt.s32.totalorder %s237, 15
      %s239 = scalar_select %p238, %s237, 15
      %s240 = smul.addr %s239, 4
      %s241 = scalar_lea.vmem %s3, %s240
      %s242 = smul.u32 8, %s17
      %s243 = smul.u32 8, %s17
      %p244 = scmp.lt.s32.totalorder %s243, 15
      %s245 = scalar_select %p244, %s243, 15
      %s246 = smul.addr %s245, 4
      %s247 = scalar_lea.vmem %s4, %s246
      %s248 = smul.u32 8, %s17
      %s249 = smul.u32 8, %s17
      %p250 = scmp.lt.s32.totalorder %s249, 15
      %s251 = scalar_select %p250, %s249, 15
      %s252 = smul.addr %s251, 4
      %s253 = scalar_lea.vmem %s5, %s252
      %s254 = smul.u32 8, %s17
      %v256 = vld [vmem:[%s235] sm:$0xff]
      %v257 = vld [vmem:[%s235 + $0x8] sm:$0xff]
      %v258 = vld [vmem:[%s235 + $0x10] sm:$0xff]
      %v259 = vld [vmem:[%s235 + $0x18] sm:$0xff]
      %v260 = vld [vmem:[%s235 + $0x20] sm:$0xff]
      %v261 = vld [vmem:[%s235 + $0x28] sm:$0xff]
      %v262 = vld [vmem:[%s235 + $0x30] sm:$0xff]
      %v263 = vld [vmem:[%s235 + $0x38] sm:$0xff]
      %v264 = vpack.c.bf16 %v257, %v256
      %v265 = vpack.c.bf16 %v259, %v258
      %v266 = vpack.c.bf16 %v261, %v260
      %v267 = vpack.c.bf16 %v263, %v262
      %v268 = vld [vmem:[%s1] sm:$0xff]
      %v269 = vld [vmem:[%s1 + $0x8] sm:$0xff]
      %v270 = vld [vmem:[%s1 + $0x10] sm:$0xff]
      %v271 = vld [vmem:[%s1 + $0x18] sm:$0xff]
      %v272 = vpack.c.bf16 %v269, %v268
      %v273 = vpack.c.bf16 %v271, %v270
      %v274 = vld [vmem:[%s2] sm:$0x1]
      %v276 = vperm.slane %v274, 0
      %vm278 = vcmask 261120
      %v280 = vsel %vm278, %v264, 0
      %v283 = vsel %vm278, %v265, 0
      %v286 = vsel %vm278, %v266, 0
      %v289 = vsel %vm278, %v267, 0
      %291 = vmatpush.bf16.msra.mxu0 0
      %292 = vmatpush.bf16.msra.mxu0 0
      %293 = vmatpush.bf16.msra.mxu0 0
      %294 = vmatpush.bf16.msra.mxu0 0
      %295 = vmatpush.bf16.msra.mxu0 0
      %296 = vmatpush.bf16.msra.mxu0 0
      %297 = vmatpush.bf16.msra.mxu0 %v273
      %298 = vmatpush.bf16.msra.mxu0 %v272
      %299 = vmatmul.bf16.gmra.mxu0 %v280
      %v300 = vpop.f32.mrf.mxu0
      %v301 = vadd.f32 %v276, %v300
      %v302 = vpop.f32.mrf.mxu0
      %v303 = vadd.f32 %v276, %v302
      %304 = vmatmul.bf16.gmra.mxu0 %v283
      %v305 = vpop.f32.mrf.mxu0
      %v306 = vadd.f32 %v276, %v305
      %v307 = vpop.f32.mrf.mxu0
      %v308 = vadd.f32 %v276, %v307
      %309 = vmatmul.bf16.gmra.mxu0 %v286
      %v310 = vpop.f32.mrf.mxu0
      %v311 = vadd.f32 %v276, %v310
      %v312 = vpop.f32.mrf.mxu0
      %v313 = vadd.f32 %v276, %v312
      %314 = vmatmul.bf16.gmra.mxu0 %v289
      %v315 = vpop.f32.mrf.mxu0
      %v316 = vadd.f32 %v276, %v315
      %v317 = vpop.f32.mrf.mxu0
      %v318 = vadd.f32 %v276, %v317
      %319 = vdwg.mxu0
      %v320 = vpack.c.bf16 %v301, %v301
      %v321 = vpack.c.bf16 %v303, %v303
      %v322 = vpack.c.bf16 %v306, %v306
      %v323 = vpack.c.bf16 %v308, %v308
      %v324 = vpack.c.bf16 %v311, %v311
      %v325 = vpack.c.bf16 %v313, %v313
      %v326 = vpack.c.bf16 %v316, %v316
      %v327 = vpack.c.bf16 %v318, %v318
      %vm328 = vcmask 257024
      %329 = vst.msk [vmem:[%s241] sm:$0xf] %vm328, %v320
      %330 = vst.msk [vmem:[%s241 + $0x4] sm:$0xf] %vm328, %v321
      %331 = vst.msk [vmem:[%s241 + $0x8] sm:$0xf] %vm328, %v322
      %332 = vst.msk [vmem:[%s241 + $0xc] sm:$0xf] %vm328, %v323
      %333 = vst.msk [vmem:[%s241 + $0x10] sm:$0xf] %vm328, %v324
      %334 = vst.msk [vmem:[%s241 + $0x14] sm:$0xf] %vm328, %v325
      %335 = vst.msk [vmem:[%s241 + $0x18] sm:$0xf] %vm328, %v326
      %336 = vst.msk [vmem:[%s241 + $0x1c] sm:$0xf] %vm328, %v327
      %345 = vrot.lane.b32.xlu0 %v320, 96
      %v346 = vpop.permute.xlu0 %345
      %347 = vrot.lane.b32.xlu0 %v321, 96
      %v348 = vpop.permute.xlu0 %347
      %349 = vrot.lane.b32.xlu0 %v322, 96
      %v350 = vpop.permute.xlu0 %349
      %351 = vrot.lane.b32.xlu0 %v323, 96
      %v352 = vpop.permute.xlu0 %351
      %353 = vrot.lane.b32.xlu0 %v324, 96
      %v354 = vpop.permute.xlu0 %353
      %355 = vrot.lane.b32.xlu0 %v325, 96
      %v356 = vpop.permute.xlu0 %355
      %357 = vrot.lane.b32.xlu0 %v326, 96
      %v358 = vpop.permute.xlu0 %357
      %359 = vrot.lane.b32.xlu0 %v327, 96
      %v360 = vpop.permute.xlu0 %359
      %369 = vst.msk [vmem:[%s247] sm:$0xf] %vm328, %v346
      %370 = vst.msk [vmem:[%s247 + $0x4] sm:$0xf] %vm328, %v348
      %371 = vst.msk [vmem:[%s247 + $0x8] sm:$0xf] %vm328, %v350
      %372 = vst.msk [vmem:[%s247 + $0xc] sm:$0xf] %vm328, %v352
      %373 = vst.msk [vmem:[%s247 + $0x10] sm:$0xf] %vm328, %v354
      %374 = vst.msk [vmem:[%s247 + $0x14] sm:$0xf] %vm328, %v356
      %375 = vst.msk [vmem:[%s247 + $0x18] sm:$0xf] %vm328, %v358
      %376 = vst.msk [vmem:[%s247 + $0x1c] sm:$0xf] %vm328, %v360
      %377 = vrot.lane.b32.xlu0 %v320, 64
      %v378 = vpop.permute.xlu0 %377
      %379 = vrot.lane.b32.xlu0 %v321, 64
      %v380 = vpop.permute.xlu0 %379
      %381 = vrot.lane.b32.xlu0 %v322, 64
      %v382 = vpop.permute.xlu0 %381
      %383 = vrot.lane.b32.xlu0 %v323, 64
      %v384 = vpop.permute.xlu0 %383
      %385 = vrot.lane.b32.xlu0 %v324, 64
      %v386 = vpop.permute.xlu0 %385
      %387 = vrot.lane.b32.xlu0 %v325, 64
      %v388 = vpop.permute.xlu0 %387
      %389 = vrot.lane.b32.xlu0 %v326, 64
      %v390 = vpop.permute.xlu0 %389
      %391 = vrot.lane.b32.xlu0 %v327, 64
      %v392 = vpop.permute.xlu0 %391
      %401 = vst.msk [vmem:[%s253] sm:$0xf] %vm328, %v378
      %402 = vst.msk [vmem:[%s253 + $0x4] sm:$0xf] %vm328, %v380
      %403 = vst.msk [vmem:[%s253 + $0x8] sm:$0xf] %vm328, %v382
      %404 = vst.msk [vmem:[%s253 + $0xc] sm:$0xf] %vm328, %v384
      %405 = vst.msk [vmem:[%s253 + $0x10] sm:$0xf] %vm328, %v386
      %406 = vst.msk [vmem:[%s253 + $0x14] sm:$0xf] %vm328, %v388
      %407 = vst.msk [vmem:[%s253 + $0x18] sm:$0xf] %vm328, %v390
      %408 = vst.msk [vmem:[%s253 + $0x1c] sm:$0xf] %vm328, %v392
      %s409 = smul.u32 8, %s17
      %p410 = scmp.lt.s32.totalorder %s409, 15
      %s411 = scalar_select %p410, %s409, 15
      %s412 = smul.addr %s411, 4
      %s413 = scalar_lea.vmem %s3, %s412
      %s414 = smul.u32 8, %s17
      %p415 = scmp.lt.s32.totalorder %s414, 15
      %s416 = scalar_select %p415, %s414, 15
      %s417 = smul.addr %s416, 4
      %s418 = scalar_lea.vmem %s4, %s417
      %s419 = smul.u32 8, %s17
      %p420 = scmp.lt.s32.totalorder %s419, 15
      %s421 = scalar_select %p420, %s419, 15
      %s422 = smul.addr %s421, 4
      %s423 = scalar_lea.vmem %s5, %s422
      // Predicated region
      $region33: #{_lambda_.3} parent=31 // pred_check
        %p424 = pneg %p103
      $region34: #{_lambda_.3} parent=31 // pred_check_branch
        %426 = sbr.rel (%p424) target = $region36
      $region35: #{_lambda_.3} parent=31 // pred_region
        %s427 = smul.u32 8, %s17
      $region36: #{_lambda_.3} parent=31 // pred_fallthru
        _
      // Predicated region
      $region37: #{_lambda_.3} parent=31 // pred_check
        %p428 = pneg %p129
      $region38: #{_lambda_.3} parent=31 // pred_check_branch
        %430 = sbr.rel (%p428) target = $region40
      $region39: #{_lambda_.3} parent=31 // pred_region
        %s431 = smul.u32 8, %s17
      $region40: #{_lambda_.3} parent=31 // pred_fallthru
        _
      // Predicated region
      $region41: #{_lambda_.3} parent=31 // pred_check
        %p432 = pneg %p155
      $region42: #{_lambda_.3} parent=31 // pred_check_branch
        %434 = sbr.rel (%p432) target = $region44
      $region43: #{_lambda_.3} parent=31 // pred_region
        %s435 = smul.u32 8, %s17
      $region44: #{_lambda_.3} parent=31 // pred_fallthru
        _
    $region32: #{_lambda_.3} parent=5 // pred_fallthru
      _
    %p436 = scmp.le.s32.totalorder 2, %s12
    // Predicated region
    $region45: #{_lambda_.3} parent=5 // pred_check
      %p437 = pneg %p436
    $region46: #{_lambda_.3} parent=5 // pred_check_branch
      %439 = sbr.rel (%p437) target = $region48
    $region47: #{_lambda_.3} parent=5 // pred_region
      %s440 = ssub.s32 %s12, 2
      // Predicated region
      $region49: #{_lambda_.3} parent=47 // pred_check
        %p441 = pneg %p109
      $region50: #{_lambda_.3} parent=47 // pred_check_branch
        %443 = sbr.rel (%p441) target = $region52
      $region51: #{_lambda_.3} parent=47 // pred_region
        %s444 = smul.u32 8, %s18
        %p445 = scmp.lt.s32.totalorder %s444, 15
        %s446 = scalar_select %p445, %s444, 15
        %s447 = smul.addr %s446, 4
        %s448 = scalar_lea.vmem %s3, %s447
      $region52: #{_lambda_.3} parent=47 // pred_fallthru
        _
      // Predicated region
      $region53: #{_lambda_.3} parent=47 // pred_check
        %p449 = pneg %p135
      $region54: #{_lambda_.3} parent=47 // pred_check_branch
        %451 = sbr.rel (%p449) target = $region56
      $region55: #{_lambda_.3} parent=47 // pred_region
        %s452 = smul.u32 8, %s18
        %p453 = scmp.lt.s32.totalorder %s452, 15
        %s454 = scalar_select %p453, %s452, 15
        %s455 = smul.addr %s454, 4
        %s456 = scalar_lea.vmem %s4, %s455
      $region56: #{_lambda_.3} parent=47 // pred_fallthru
        _
      // Predicated region
      $region57: #{_lambda_.3} parent=47 // pred_check
        %p457 = pneg %p161
      $region58: #{_lambda_.3} parent=47 // pred_check_branch
        %459 = sbr.rel (%p457) target = $region60
      $region59: #{_lambda_.3} parent=47 // pred_region
        %s460 = smul.u32 8, %s18
        %p461 = scmp.lt.s32.totalorder %s460, 15
        %s462 = scalar_select %p461, %s460, 15
        %s463 = smul.addr %s462, 4
        %s464 = scalar_lea.vmem %s5, %s463
      $region60: #{_lambda_.3} parent=47 // pred_fallthru
        _
    $region48: #{_lambda_.3} parent=5 // pred_fallthru
      _
  $region6: #{_lambda_.3} parent=0 // loop_footer
    %s16 = sadd.s32 1, %s12
  $region7: #{_lambda_.3} parent=0 // loop_footer_branch
    %11 = sbr.rel target = $region3
  $region8: #{_lambda_.3} parent=0 // loop_exit
    _

// kernel: _lambda_.4
$region0: #{_lambda_.4}
  #allocation0 [shape = 'u32[]', space=smem, size = 0x4, offset = 0x4, fixed_abs, tag = 'smem constant byte address 0x4 - core index']
  #allocation1 [shape = 'u32[72,128]{1,0:T(1,128)}', space=vmem, size = 0x9000, scoped, tag = 'internal scratch']
  %s0 = inlined_call_operand.vmem [shape: bf16[16,8,32], index: 0, kind: input, shape index: {}]
  %s1 = inlined_call_operand.vmem [shape: bf16[16,8,32], index: 1, kind: input, shape index: {}]
  %s2 = inlined_call_operand.vmem [shape: bf16[16,8,32], index: 2, kind: input, shape index: {}]
  %s3 = inlined_call_operand.vmem [shape: bf16[16,8,32], index: 3, kind: output, shape index: {}]
  %s4 = sld [smem:[#allocation0]]
  $region45: #{_lambda_.4} parent=0
    _
  %s6 = ssub.s32 1, %s4
  %s7 = scalar_select 0, %s6, %s4
  loop: start=0, step=1, limit=4
  $region2: #{_lambda_.4} parent=0 // loop_pre_header
    _
  $region3: #{_lambda_.4} parent=0 // loop_header
    %s9 = sphi 0, %s13
    %p10 = scmp.ge.s32.totalorder %s9, 4
    %s19 = sphi 0, %s21
    %s22 = sphi 0, %s19
    %s23 = sphi 0, %s22
    %s39 = sphi 0, %s23
    %s45 = sphi 0, %s47
    %s48 = sphi 0, %s45
    %s49 = sphi 0, %s48
    %s65 = sphi 0, %s49
    %s71 = sphi 0, %s73
    %s74 = sphi 0, %s71
    %s75 = sphi 0, %s74
    %s91 = sphi 0, %s75
    %s97 = sphi 0, %s99
    %s100 = sphi 0, %s97
    %s101 = sphi 0, %s100
    %s117 = sphi 0, %s101
  $region4: #{_lambda_.4} parent=0 // loop_header_branch
    %12 = sbr.rel (%p10) target = $region8
  $region5: #{_lambda_.4} parent=0 // loop_body
    %s14 = ssub.s32 %s9, 1
    %s15 = ssub.s32 %s9, 2
    %s16 = sadd.s32 %s9, 1
    %s17 = ssub.s32 %s9, %s16
    %p18 = scmp.eq.s32.totalorder %s17, 0
    %s20 = sadd.s32 %s19, 1
    %s21 = scalar_select %p18, %s19, %s20
    %p24 = pneg %p18
    %p25 = scmp.eq.s32.totalorder %s9, 1
    %p26 = por %p24, %p25
    %p27 = scmp.ne.s32.totalorder %s19, %s22
    %p28 = scmp.eq.s32.totalorder %s9, 0
    %p29 = por %p27, %p28
    %p30 = scmp.ne.s32.totalorder %s19, %s22
    %p31 = scmp.eq.s32.totalorder %s14, 1
    %p32 = por %p30, %p31
    %p33 = scmp.ne.s32.totalorder %s22, %s23
    %p34 = scmp.eq.s32.totalorder %s14, 0
    %p35 = por %p33, %p34
    %p36 = scmp.ne.s32.totalorder %s22, %s23
    %p37 = scmp.eq.s32.totalorder %s15, 1
    %p38 = por %p36, %p37
    %p40 = scmp.ne.s32.totalorder %s23, %s39
    %p41 = scmp.eq.s32.totalorder %s15, 0
    %p42 = por %p40, %p41
    %s43 = ssub.s32 %s9, %s16
    %p44 = scmp.eq.s32.totalorder %s43, 0
    %s46 = sadd.s32 %s45, 1
    %s47 = scalar_select %p44, %s45, %s46
    %p50 = pneg %p44
    %p51 = scmp.eq.s32.totalorder %s9, 1
    %p52 = por %p50, %p51
    %p53 = scmp.ne.s32.totalorder %s45, %s48
    %p54 = scmp.eq.s32.totalorder %s9, 0
    %p55 = por %p53, %p54
    %p56 = scmp.ne.s32.totalorder %s45, %s48
    %p57 = scmp.eq.s32.totalorder %s14, 1
    %p58 = por %p56, %p57
    %p59 = scmp.ne.s32.totalorder %s48, %s49
    %p60 = scmp.eq.s32.totalorder %s14, 0
    %p61 = por %p59, %p60
    %p62 = scmp.ne.s32.totalorder %s48, %s49
    %p63 = scmp.eq.s32.totalorder %s15, 1
    %p64 = por %p62, %p63
    %p66 = scmp.ne.s32.totalorder %s49, %s65
    %p67 = scmp.eq.s32.totalorder %s15, 0
    %p68 = por %p66, %p67
    %s69 = ssub.s32 %s9, %s16
    %p70 = scmp.eq.s32.totalorder %s69, 0
    %s72 = sadd.s32 %s71, 1
    %s73 = scalar_select %p70, %s71, %s72
    %p76 = pneg %p70
    %p77 = scmp.eq.s32.totalorder %s9, 1
    %p78 = por %p76, %p77
    %p79 = scmp.ne.s32.totalorder %s71, %s74
    %p80 = scmp.eq.s32.totalorder %s9, 0
    %p81 = por %p79, %p80
    %p82 = scmp.ne.s32.totalorder %s71, %s74
    %p83 = scmp.eq.s32.totalorder %s14, 1
    %p84 = por %p82, %p83
    %p85 = scmp.ne.s32.totalorder %s74, %s75
    %p86 = scmp.eq.s32.totalorder %s14, 0
    %p87 = por %p85, %p86
    %p88 = scmp.ne.s32.totalorder %s74, %s75
    %p89 = scmp.eq.s32.totalorder %s15, 1
    %p90 = por %p88, %p89
    %p92 = scmp.ne.s32.totalorder %s75, %s91
    %p93 = scmp.eq.s32.totalorder %s15, 0
    %p94 = por %p92, %p93
    %s95 = ssub.s32 %s9, %s16
    %p96 = scmp.eq.s32.totalorder %s95, 0
    %s98 = sadd.s32 %s97, 1
    %s99 = scalar_select %p96, %s97, %s98
    %p102 = pneg %p96
    %p103 = scmp.eq.s32.totalorder %s9, 1
    %p104 = por %p102, %p103
    %p105 = scmp.ne.s32.totalorder %s97, %s100
    %p106 = scmp.eq.s32.totalorder %s9, 0
    %p107 = por %p105, %p106
    %p108 = scmp.ne.s32.totalorder %s97, %s100
    %p109 = scmp.eq.s32.totalorder %s14, 1
    %p110 = por %p108, %p109
    %p111 = scmp.ne.s32.totalorder %s100, %s101
    %p112 = scmp.eq.s32.totalorder %s14, 0
    %p113 = por %p111, %p112
    %p114 = scmp.ne.s32.totalorder %s100, %s101
    %p115 = scmp.eq.s32.totalorder %s15, 1
    %p116 = por %p114, %p115
    %p118 = scmp.ne.s32.totalorder %s101, %s117
    %p119 = scmp.eq.s32.totalorder %s15, 0
    %p120 = por %p118, %p119
    %p121 = scmp.le.s32.totalorder 1, %s9
    %p122 = scmp.lt.s32.totalorder %s9, 3
    %p123 = pnand %p121, %p122
    %p124 = pneg %p123
    // Predicated region
    $region9: #{_lambda_.4} parent=5 // pred_check
      _
    $region10: #{_lambda_.4} parent=5 // pred_check_branch
      %126 = sbr.rel (%p123) target = $region12
    $region11: #{_lambda_.4} parent=5 // pred_region
      %s127 = ssub.s32 %s9, 1
    $region12: #{_lambda_.4} parent=5 // pred_fallthru
      _
    %p128 = scmp.lt.s32.totalorder %s9, 2
    // Predicated region
    $region13: #{_lambda_.4} parent=5 // pred_check
      %p129 = pneg %p128
    $region14: #{_lambda_.4} parent=5 // pred_check_branch
      %131 = sbr.rel (%p129) target = $region16
    $region15: #{_lambda_.4} parent=5 // pred_region
      // Predicated region
      $region17: #{_lambda_.4} parent=15 // pred_check
        %p132 = pneg %p29
      $region18: #{_lambda_.4} parent=15 // pred_check_branch
        %134 = sbr.rel (%p132) target = $region20
      $region19: #{_lambda_.4} parent=15 // pred_region
        %s135 = smul.u32 8, %s9
        %p136 = scmp.lt.s32.totalorder %s135, 15
        %s137 = scalar_select %p136, %s135, 15
        %s138 = smul.addr %s137, 4
        %s139 = scalar_lea.vmem %s0, %s138
        %s140 = smul.u32 8, %s9
      $region20: #{_lambda_.4} parent=15 // pred_fallthru
        _
      // Predicated region
      $region21: #{_lambda_.4} parent=15 // pred_check
        %p141 = pneg %p55
      $region22: #{_lambda_.4} parent=15 // pred_check_branch
        %143 = sbr.rel (%p141) target = $region24
      $region23: #{_lambda_.4} parent=15 // pred_region
        %s144 = smul.u32 8, %s9
        %p145 = scmp.lt.s32.totalorder %s144, 15
        %s146 = scalar_select %p145, %s144, 15
        %s147 = smul.addr %s146, 4
        %s148 = scalar_lea.vmem %s1, %s147
        %s149 = smul.u32 8, %s9
      $region24: #{_lambda_.4} parent=15 // pred_fallthru
        _
      // Predicated region
      $region25: #{_lambda_.4} parent=15 // pred_check
        %p150 = pneg %p81
      $region26: #{_lambda_.4} parent=15 // pred_check_branch
        %152 = sbr.rel (%p150) target = $region28
      $region27: #{_lambda_.4} parent=15 // pred_region
        %s153 = smul.u32 8, %s9
        %p154 = scmp.lt.s32.totalorder %s153, 15
        %s155 = scalar_select %p154, %s153, 15
        %s156 = smul.addr %s155, 4
        %s157 = scalar_lea.vmem %s2, %s156
        %s158 = smul.u32 8, %s9
      $region28: #{_lambda_.4} parent=15 // pred_fallthru
        _
    $region16: #{_lambda_.4} parent=5 // pred_fallthru
      _
    %p159 = scmp.le.s32.totalorder 1, %s9
    %p160 = scmp.lt.s32.totalorder %s9, 3
    %p161 = pnand %p159, %p160
    %p162 = pneg %p161
    // Predicated region
    $region29: #{_lambda_.4} parent=5 // pred_check
      _
    $region30: #{_lambda_.4} parent=5 // pred_check_branch
      %164 = sbr.rel (%p161) target = $region32
    $region31: #{_lambda_.4} parent=5 // pred_region
      %s165 = ssub.s32 %s9, 1
      %s166 = smul.u32 8, %s14
      %p167 = scmp.lt.s32.totalorder %s166, 15
      %s168 = scalar_select %p167, %s166, 15
      %s169 = smul.addr %s168, 4
      %s170 = scalar_lea.vmem %s0, %s169
      %p171 = pneg %p35
      %p172 = pneg %p32
      %s173 = smul.u32 8, %s14
      %p174 = scmp.lt.s32.totalorder %s173, 15
      %s175 = scalar_select %p174, %s173, 15
      %s176 = smul.addr %s175, 4
      %s177 = scalar_lea.vmem %s1, %s176
      %p178 = pneg %p61
      %p179 = pneg %p58
      %s180 = smul.u32 8, %s14
      %p181 = scmp.lt.s32.totalorder %s180, 15
      %s182 = scalar_select %p181, %s180, 15
      %s183 = smul.addr %s182, 4
      %s184 = scalar_lea.vmem %s2, %s183
      %p185 = pneg %p87
      %p186 = pneg %p84
      %p187 = pneg %p113
      %p188 = pneg %p110
      %s189 = smul.u32 8, %s14
      %p190 = scmp.lt.s32.totalorder %s189, 15
      %s191 = scalar_select %p190, %s189, 15
      %s192 = smul.addr %s191, 4
      %s193 = scalar_lea.vmem %s3, %s192
      %s194 = smul.u32 8, %s14
      %p195 = scmp.lt.s32.totalorder %s194, 15
      %s196 = scalar_select %p195, %s194, 15
      %s197 = smul.addr %s196, 4
      %s198 = scalar_lea.vmem %s0, %s197
      %s199 = smul.u32 8, %s14
      %s200 = smul.u32 8, %s14
      %p201 = scmp.lt.s32.totalorder %s200, 15
      %s202 = scalar_select %p201, %s200, 15
      %s203 = smul.addr %s202, 4
      %s204 = scalar_lea.vmem %s1, %s203
      %s205 = smul.u32 8, %s14
      %s206 = smul.u32 8, %s14
      %p207 = scmp.lt.s32.totalorder %s206, 15
      %s208 = scalar_select %p207, %s206, 15
      %s209 = smul.addr %s208, 4
      %s210 = scalar_lea.vmem %s2, %s209
      %s211 = smul.u32 8, %s14
      %s212 = smul.u32 8, %s14
      %p213 = scmp.lt.s32.totalorder %s212, 15
      %s214 = scalar_select %p213, %s212, 15
      %s215 = smul.addr %s214, 4
      %s216 = scalar_lea.vmem %s3, %s215
      %s217 = smul.u32 8, %s14
      %v219 = vld [vmem:[%s198] sm:$0xf]
      %v220 = vld [vmem:[%s198 + $0x4] sm:$0xf]
      %v221 = vld [vmem:[%s198 + $0x8] sm:$0xf]
      %v222 = vld [vmem:[%s198 + $0xc] sm:$0xf]
      %v223 = vld [vmem:[%s198 + $0x10] sm:$0xf]
      %v224 = vld [vmem:[%s198 + $0x14] sm:$0xf]
      %v225 = vld [vmem:[%s198 + $0x18] sm:$0xf]
      %v226 = vld [vmem:[%s198 + $0x1c] sm:$0xf]
      %v227 = vld [vmem:[%s204] sm:$0xf]
      %v228 = vld [vmem:[%s204 + $0x4] sm:$0xf]
      %v229 = vld [vmem:[%s204 + $0x8] sm:$0xf]
      %v230 = vld [vmem:[%s204 + $0xc] sm:$0xf]
      %v231 = vld [vmem:[%s204 + $0x10] sm:$0xf]
      %v232 = vld [vmem:[%s204 + $0x14] sm:$0xf]
      %v233 = vld [vmem:[%s204 + $0x18] sm:$0xf]
      %v234 = vld [vmem:[%s204 + $0x1c] sm:$0xf]
      %v235 = vld [vmem:[%s210] sm:$0xf]
      %v236 = vld [vmem:[%s210 + $0x4] sm:$0xf]
      %v237 = vld [vmem:[%s210 + $0x8] sm:$0xf]
      %v238 = vld [vmem:[%s210 + $0xc] sm:$0xf]
      %v239 = vld [vmem:[%s210 + $0x10] sm:$0xf]
      %v240 = vld [vmem:[%s210 + $0x14] sm:$0xf]
      %v241 = vld [vmem:[%s210 + $0x18] sm:$0xf]
      %v242 = vld [vmem:[%s210 + $0x1c] sm:$0xf]
      %251 = vrot.lane.b32.xlu0 %v219, 120
      %v252 = vpop.permute.xlu0 %251
      %253 = vrot.lane.b32.xlu0 %v220, 120
      %v254 = vpop.permute.xlu0 %253
      %255 = vrot.lane.b32.xlu0 %v221, 120
      %v256 = vpop.permute.xlu0 %255
      %257 = vrot.lane.b32.xlu0 %v222, 120
      %v258 = vpop.permute.xlu0 %257
      %259 = vrot.lane.b32.xlu0 %v223, 120
      %v260 = vpop.permute.xlu0 %259
      %261 = vrot.lane.b32.xlu0 %v224, 120
      %v262 = vpop.permute.xlu0 %261
      %263 = vrot.lane.b32.xlu0 %v225, 120
      %v264 = vpop.permute.xlu0 %263
      %265 = vrot.lane.b32.xlu0 %v226, 120
      %v266 = vpop.permute.xlu0 %265
      %267 = vrot.lane.b32.xlu0 %v219, 112
      %v268 = vpop.permute.xlu0 %267
      %269 = vrot.lane.b32.xlu0 %v220, 112
      %v270 = vpop.permute.xlu0 %269
      %271 = vrot.lane.b32.xlu0 %v221, 112
      %v272 = vpop.permute.xlu0 %271
      %273 = vrot.lane.b32.xlu0 %v222, 112
      %v274 = vpop.permute.xlu0 %273
      %275 = vrot.lane.b32.xlu0 %v223, 112
      %v276 = vpop.permute.xlu0 %275
      %277 = vrot.lane.b32.xlu0 %v224, 112
      %v278 = vpop.permute.xlu0 %277
      %279 = vrot.lane.b32.xlu0 %v225, 112
      %v280 = vpop.permute.xlu0 %279
      %281 = vrot.lane.b32.xlu0 %v226, 112
      %v282 = vpop.permute.xlu0 %281
      %283 = vrot.lane.b32.xlu0 %v219, 104
      %v284 = vpop.permute.xlu0 %283
      %285 = vrot.lane.b32.xlu0 %v220, 104
      %v286 = vpop.permute.xlu0 %285
      %287 = vrot.lane.b32.xlu0 %v221, 104
      %v288 = vpop.permute.xlu0 %287
      %289 = vrot.lane.b32.xlu0 %v222, 104
      %v290 = vpop.permute.xlu0 %289
      %291 = vrot.lane.b32.xlu0 %v223, 104
      %v292 = vpop.permute.xlu0 %291
      %293 = vrot.lane.b32.xlu0 %v224, 104
      %v294 = vpop.permute.xlu0 %293
      %295 = vrot.lane.b32.xlu0 %v225, 104
      %v296 = vpop.permute.xlu0 %295
      %297 = vrot.lane.b32.xlu0 %v226, 104
      %v298 = vpop.permute.xlu0 %297
      %307 = vrot.lane.b32.xlu0 %v227, 120
      %v308 = vpop.permute.xlu0 %307
      %309 = vrot.lane.b32.xlu0 %v228, 120
      %v310 = vpop.permute.xlu0 %309
      %311 = vrot.lane.b32.xlu0 %v229, 120
      %v312 = vpop.permute.xlu0 %311
      %313 = vrot.lane.b32.xlu0 %v230, 120
      %v314 = vpop.permute.xlu0 %313
      %315 = vrot.lane.b32.xlu0 %v231, 120
      %v316 = vpop.permute.xlu0 %315
      %317 = vrot.lane.b32.xlu0 %v232, 120
      %v318 = vpop.permute.xlu0 %317
      %319 = vrot.lane.b32.xlu0 %v233, 120
      %v320 = vpop.permute.xlu0 %319
      %321 = vrot.lane.b32.xlu0 %v234, 120
      %v322 = vpop.permute.xlu0 %321
      %323 = vrot.lane.b32.xlu0 %v227, 112
      %v324 = vpop.permute.xlu0 %323
      %325 = vrot.lane.b32.xlu0 %v228, 112
      %v326 = vpop.permute.xlu0 %325
      %327 = vrot.lane.b32.xlu0 %v229, 112
      %v328 = vpop.permute.xlu0 %327
      %329 = vrot.lane.b32.xlu0 %v230, 112
      %v330 = vpop.permute.xlu0 %329
      %331 = vrot.lane.b32.xlu0 %v231, 112
      %v332 = vpop.permute.xlu0 %331
      %333 = vrot.lane.b32.xlu0 %v232, 112
      %v334 = vpop.permute.xlu0 %333
      %335 = vrot.lane.b32.xlu0 %v233, 112
      %v336 = vpop.permute.xlu0 %335
      %337 = vrot.lane.b32.xlu0 %v234, 112
      %v338 = vpop.permute.xlu0 %337
      %339 = vrot.lane.b32.xlu0 %v227, 104
      %v340 = vpop.permute.xlu0 %339
      %341 = vrot.lane.b32.xlu0 %v228, 104
      %v342 = vpop.permute.xlu0 %341
      %343 = vrot.lane.b32.xlu0 %v229, 104
      %v344 = vpop.permute.xlu0 %343
      %345 = vrot.lane.b32.xlu0 %v230, 104
      %v346 = vpop.permute.xlu0 %345
      %347 = vrot.lane.b32.xlu0 %v231, 104
      %v348 = vpop.permute.xlu0 %347
      %349 = vrot.lane.b32.xlu0 %v232, 104
      %v350 = vpop.permute.xlu0 %349
      %351 = vrot.lane.b32.xlu0 %v233, 104
      %v352 = vpop.permute.xlu0 %351
      %353 = vrot.lane.b32.xlu0 %v234, 104
      %v354 = vpop.permute.xlu0 %353
      %363 = vrot.lane.b32.xlu0 %v235, 120
      %v364 = vpop.permute.xlu0 %363
      %365 = vrot.lane.b32.xlu0 %v236, 120
      %v366 = vpop.permute.xlu0 %365
      %367 = vrot.lane.b32.xlu0 %v237, 120
      %v368 = vpop.permute.xlu0 %367
      %369 = vrot.lane.b32.xlu0 %v238, 120
      %v370 = vpop.permute.xlu0 %369
      %371 = vrot.lane.b32.xlu0 %v239, 120
      %v372 = vpop.permute.xlu0 %371
      %373 = vrot.lane.b32.xlu0 %v240, 120
      %v374 = vpop.permute.xlu0 %373
      %375 = vrot.lane.b32.xlu0 %v241, 120
      %v376 = vpop.permute.xlu0 %375
      %377 = vrot.lane.b32.xlu0 %v242, 120
      %v378 = vpop.permute.xlu0 %377
      %379 = vrot.lane.b32.xlu0 %v235, 112
      %v380 = vpop.permute.xlu0 %379
      %381 = vrot.lane.b32.xlu0 %v236, 112
      %v382 = vpop.permute.xlu0 %381
      %383 = vrot.lane.b32.xlu0 %v237, 112
      %v384 = vpop.permute.xlu0 %383
      %385 = vrot.lane.b32.xlu0 %v238, 112
      %v386 = vpop.permute.xlu0 %385
      %387 = vrot.lane.b32.xlu0 %v239, 112
      %v388 = vpop.permute.xlu0 %387
      %389 = vrot.lane.b32.xlu0 %v240, 112
      %v390 = vpop.permute.xlu0 %389
      %391 = vrot.lane.b32.xlu0 %v241, 112
      %v392 = vpop.permute.xlu0 %391
      %393 = vrot.lane.b32.xlu0 %v242, 112
      %v394 = vpop.permute.xlu0 %393
      %395 = vrot.lane.b32.xlu0 %v235, 104
      %v396 = vpop.permute.xlu0 %395
      %397 = vrot.lane.b32.xlu0 %v236, 104
      %v398 = vpop.permute.xlu0 %397
      %399 = vrot.lane.b32.xlu0 %v237, 104
      %v400 = vpop.permute.xlu0 %399
      %401 = vrot.lane.b32.xlu0 %v238, 104
      %v402 = vpop.permute.xlu0 %401
      %403 = vrot.lane.b32.xlu0 %v239, 104
      %v404 = vpop.permute.xlu0 %403
      %405 = vrot.lane.b32.xlu0 %v240, 104
      %v406 = vpop.permute.xlu0 %405
      %407 = vrot.lane.b32.xlu0 %v241, 104
      %v408 = vpop.permute.xlu0 %407
      %409 = vrot.lane.b32.xlu0 %v242, 104
      %v410 = vpop.permute.xlu0 %409
      %vm411 = vcmask 64512
      %v413 = vsel %vm411, %v219, 0
      %v416 = vsel %vm411, %v227, 0
      %418 = vmatpush.bf16.xpose.msra.mxu0 0
      %419 = vmatpush.bf16.xpose.msra.mxu0 0
      %420 = vmatpush.bf16.xpose.msra.mxu0 0
      %421 = vmatpush.bf16.xpose.msra.mxu0 0
      %422 = vmatpush.bf16.xpose.msra.mxu0 0
      %423 = vmatpush.bf16.xpose.msra.mxu0 0
      %424 = vmatpush.bf16.xpose.msra.mxu0 0
      %425 = vmatpush.bf16.xpose.msra.mxu0 %v416
      %426 = vmatmul.bf16.gmra.mxu0 %v413
      %v427 = vpop.f32.mrf.mxu0
      %v428 = vadd.f32 0.0, %v427
      %v429 = vpop.f32.mrf.mxu0
      %430 = vdwg.mxu0
      %v432 = vsel %vm411, %v220, 0
      %v435 = vsel %vm411, %v228, 0
      %437 = vmatpush.bf16.xpose.msra.mxu0 0
      %438 = vmatpush.bf16.xpose.msra.mxu0 0
      %439 = vmatpush.bf16.xpose.msra.mxu0 0
      %440 = vmatpush.bf16.xpose.msra.mxu0 0
      %441 = vmatpush.bf16.xpose.msra.mxu0 0
      %442 = vmatpush.bf16.xpose.msra.mxu0 0
      %443 = vmatpush.bf16.xpose.msra.mxu0 0
      %444 = vmatpush.bf16.xpose.msra.mxu0 %v435
      %445 = vmatmul.bf16.gmra.mxu0 %v432
      %v446 = vpop.f32.mrf.mxu0
      %v447 = vadd.f32 0.0, %v446
      %v448 = vpop.f32.mrf.mxu0
      %449 = vdwg.mxu0
      %v451 = vsel %vm411, %v221, 0
      %v454 = vsel %vm411, %v229, 0
      %456 = vmatpush.bf16.xpose.msra.mxu0 0
      %457 = vmatpush.bf16.xpose.msra.mxu0 0
      %458 = vmatpush.bf16.xpose.msra.mxu0 0
      %459 = vmatpush.bf16.xpose.msra.mxu0 0
      %460 = vmatpush.bf16.xpose.msra.mxu0 0
      %461 = vmatpush.bf16.xpose.msra.mxu0 0
      %462 = vmatpush.bf16.xpose.msra.mxu0 0
      %463 = vmatpush.bf16.xpose.msra.mxu0 %v454
      %464 = vmatmul.bf16.gmra.mxu0 %v451
      %v465 = vpop.f32.mrf.mxu0
      %v466 = vadd.f32 0.0, %v465
      %v467 = vpop.f32.mrf.mxu0
      %468 = vdwg.mxu0
      %v470 = vsel %vm411, %v222, 0
      %v473 = vsel %vm411, %v230, 0
      %475 = vmatpush.bf16.xpose.msra.mxu0 0
      %476 = vmatpush.bf16.xpose.msra.mxu0 0
      %477 = vmatpush.bf16.xpose.msra.mxu0 0
      %478 = vmatpush.bf16.xpose.msra.mxu0 0
      %479 = vmatpush.bf16.xpose.msra.mxu0 0
      %480 = vmatpush.bf16.xpose.msra.mxu0 0
      %481 = vmatpush.bf16.xpose.msra.mxu0 0
      %482 = vmatpush.bf16.xpose.msra.mxu0 %v473
      %483 = vmatmul.bf16.gmra.mxu0 %v470
      %v484 = vpop.f32.mrf.mxu0
      %v485 = vadd.f32 0.0, %v484
      %v486 = vpop.f32.mrf.mxu0
      %487 = vdwg.mxu0
      %v489 = vsel %vm411, %v223, 0
      %v492 = vsel %vm411, %v231, 0
      %494 = vmatpush.bf16.xpose.msra.mxu0 0
      %495 = vmatpush.bf16.xpose.msra.mxu0 0
      %496 = vmatpush.bf16.xpose.msra.mxu0 0
      %497 = vmatpush.bf16.xpose.msra.mxu0 0
      %498 = vmatpush.bf16.xpose.msra.mxu0 0
      %499 = vmatpush.bf16.xpose.msra.mxu0 0
      %500 = vmatpush.bf16.xpose.msra.mxu0 0
      %501 = vmatpush.bf16.xpose.msra.mxu0 %v492
      %502 = vmatmul.bf16.gmra.mxu0 %v489
      %v503 = vpop.f32.mrf.mxu0
      %v504 = vadd.f32 0.0, %v503
      %v505 = vpop.f32.mrf.mxu0
      %506 = vdwg.mxu0
      %v508 = vsel %vm411, %v224, 0
      %v511 = vsel %vm411, %v232, 0
      %513 = vmatpush.bf16.xpose.msra.mxu0 0
      %514 = vmatpush.bf16.xpose.msra.mxu0 0
      %515 = vmatpush.bf16.xpose.msra.mxu0 0
      %516 = vmatpush.bf16.xpose.msra.mxu0 0
      %517 = vmatpush.bf16.xpose.msra.mxu0 0
      %518 = vmatpush.bf16.xpose.msra.mxu0 0
      %519 = vmatpush.bf16.xpose.msra.mxu0 0
      %520 = vmatpush.bf16.xpose.msra.mxu0 %v511
      %521 = vmatmul.bf16.gmra.mxu0 %v508
      %v522 = vpop.f32.mrf.mxu0
      %v523 = vadd.f32 0.0, %v522
      %v524 = vpop.f32.mrf.mxu0
      %525 = vdwg.mxu0
      %v527 = vsel %vm411, %v225, 0
      %v530 = vsel %vm411, %v233, 0
      %532 = vmatpush.bf16.xpose.msra.mxu0 0
      %533 = vmatpush.bf16.xpose.msra.mxu0 0
      %534 = vmatpush.bf16.xpose.msra.mxu0 0
      %535 = vmatpush.bf16.xpose.msra.mxu0 0
      %536 = vmatpush.bf16.xpose.msra.mxu0 0
      %537 = vmatpush.bf16.xpose.msra.mxu0 0
      %538 = vmatpush.bf16.xpose.msra.mxu0 0
      %539 = vmatpush.bf16.xpose.msra.mxu0 %v530
      %540 = vmatmul.bf16.gmra.mxu0 %v527
      %v541 = vpop.f32.mrf.mxu0
      %v542 = vadd.f32 0.0, %v541
      %v543 = vpop.f32.mrf.mxu0
      %544 = vdwg.mxu0
      %v546 = vsel %vm411, %v226, 0
      %v549 = vsel %vm411, %v234, 0
      %551 = vmatpush.bf16.xpose.msra.mxu0 0
      %552 = vmatpush.bf16.xpose.msra.mxu0 0
      %553 = vmatpush.bf16.xpose.msra.mxu0 0
      %554 = vmatpush.bf16.xpose.msra.mxu0 0
      %555 = vmatpush.bf16.xpose.msra.mxu0 0
      %556 = vmatpush.bf16.xpose.msra.mxu0 0
      %557 = vmatpush.bf16.xpose.msra.mxu0 0
      %558 = vmatpush.bf16.xpose.msra.mxu0 %v549
      %559 = vmatmul.bf16.gmra.mxu0 %v546
      %v560 = vpop.f32.mrf.mxu0
      %v561 = vadd.f32 0.0, %v560
      %v562 = vpop.f32.mrf.mxu0
      %563 = vdwg.mxu0
      %v565 = vsel %vm411, %v252, 0
      %v568 = vsel %vm411, %v308, 0
      %570 = vmatpush.bf16.xpose.msra.mxu0 0
      %571 = vmatpush.bf16.xpose.msra.mxu0 0
      %572 = vmatpush.bf16.xpose.msra.mxu0 0
      %573 = vmatpush.bf16.xpose.msra.mxu0 0
      %574 = vmatpush.bf16.xpose.msra.mxu0 0
      %575 = vmatpush.bf16.xpose.msra.mxu0 0
      %576 = vmatpush.bf16.xpose.msra.mxu0 0
      %577 = vmatpush.bf16.xpose.msra.mxu0 %v568
      %578 = vmatmul.bf16.gmra.mxu0 %v565
      %v579 = vpop.f32.mrf.mxu0
      %v580 = vadd.f32 0.0, %v579
      %v581 = vpop.f32.mrf.mxu0
      %582 = vdwg.mxu0
      %v584 = vsel %vm411, %v254, 0
      %v587 = vsel %vm411, %v310, 0
      %589 = vmatpush.bf16.xpose.msra.mxu0 0
      %590 = vmatpush.bf16.xpose.msra.mxu0 0
      %591 = vmatpush.bf16.xpose.msra.mxu0 0
      %592 = vmatpush.bf16.xpose.msra.mxu0 0
      %593 = vmatpush.bf16.xpose.msra.mxu0 0
      %594 = vmatpush.bf16.xpose.msra.mxu0 0
      %595 = vmatpush.bf16.xpose.msra.mxu0 0
      %596 = vmatpush.bf16.xpose.msra.mxu0 %v587
      %597 = vmatmul.bf16.gmra.mxu0 %v584
      %v598 = vpop.f32.mrf.mxu0
      %v599 = vadd.f32 0.0, %v598
      %v600 = vpop.f32.mrf.mxu0
      %601 = vdwg.mxu0
      %v603 = vsel %vm411, %v256, 0
      %v606 = vsel %vm411, %v312, 0
      %608 = vmatpush.bf16.xpose.msra.mxu0 0
      %609 = vmatpush.bf16.xpose.msra.mxu0 0
      %610 = vmatpush.bf16.xpose.msra.mxu0 0
      %611 = vmatpush.bf16.xpose.msra.mxu0 0
      %612 = vmatpush.bf16.xpose.msra.mxu0 0
      %613 = vmatpush.bf16.xpose.msra.mxu0 0
      %614 = vmatpush.bf16.xpose.msra.mxu0 0
      %615 = vmatpush.bf16.xpose.msra.mxu0 %v606
      %616 = vmatmul.bf16.gmra.mxu0 %v603
      %v617 = vpop.f32.mrf.mxu0
      %v618 = vadd.f32 0.0, %v617
      %v619 = vpop.f32.mrf.mxu0
      %620 = vdwg.mxu0
      %v622 = vsel %vm411, %v258, 0
      %v625 = vsel %vm411, %v314, 0
      %627 = vmatpush.bf16.xpose.msra.mxu0 0
      %628 = vmatpush.bf16.xpose.msra.mxu0 0
      %629 = vmatpush.bf16.xpose.msra.mxu0 0
      %630 = vmatpush.bf16.xpose.msra.mxu0 0
      %631 = vmatpush.bf16.xpose.msra.mxu0 0
      %632 = vmatpush.bf16.xpose.msra.mxu0 0
      %633 = vmatpush.bf16.xpose.msra.mxu0 0
      %634 = vmatpush.bf16.xpose.msra.mxu0 %v625
      %635 = vmatmul.bf16.gmra.mxu0 %v622
      %v636 = vpop.f32.mrf.mxu0
      %v637 = vadd.f32 0.0, %v636
      %v638 = vpop.f32.mrf.mxu0
      %639 = vdwg.mxu0
      %v641 = vsel %vm411, %v260, 0
      %v644 = vsel %vm411, %v316, 0
      %646 = vmatpush.bf16.xpose.msra.mxu0 0
      %647 = vmatpush.bf16.xpose.msra.mxu0 0
      %648 = vmatpush.bf16.xpose.msra.mxu0 0
      %649 = vmatpush.bf16.xpose.msra.mxu0 0
      %650 = vmatpush.bf16.xpose.msra.mxu0 0
      %651 = vmatpush.bf16.xpose.msra.mxu0 0
      %652 = vmatpush.bf16.xpose.msra.mxu0 0
      %653 = vmatpush.bf16.xpose.msra.mxu0 %v644
      %654 = vmatmul.bf16.gmra.mxu0 %v641
      %v655 = vpop.f32.mrf.mxu0
      %v656 = vadd.f32 0.0, %v655
      %v657 = vpop.f32.mrf.mxu0
      %658 = vdwg.mxu0
      %v660 = vsel %vm411, %v262, 0
      %v663 = vsel %vm411, %v318, 0
      %665 = vmatpush.bf16.xpose.msra.mxu0 0
      %666 = vmatpush.bf16.xpose.msra.mxu0 0
      %667 = vmatpush.bf16.xpose.msra.mxu0 0
      %668 = vmatpush.bf16.xpose.msra.mxu0 0
      %669 = vmatpush.bf16.xpose.msra.mxu0 0
      %670 = vmatpush.bf16.xpose.msra.mxu0 0
      %671 = vmatpush.bf16.xpose.msra.mxu0 0
      %672 = vmatpush.bf16.xpose.msra.mxu0 %v663
      %673 = vmatmul.bf16.gmra.mxu0 %v660
      %v674 = vpop.f32.mrf.mxu0
      %v675 = vadd.f32 0.0, %v674
      %v676 = vpop.f32.mrf.mxu0
      %677 = vdwg.mxu0
      %v679 = vsel %vm411, %v264, 0
      %v682 = vsel %vm411, %v320, 0
      %684 = vmatpush.bf16.xpose.msra.mxu0 0
      %685 = vmatpush.bf16.xpose.msra.mxu0 0
      %686 = vmatpush.bf16.xpose.msra.mxu0 0
      %687 = vmatpush.bf16.xpose.msra.mxu0 0
      %688 = vmatpush.bf16.xpose.msra.mxu0 0
      %689 = vmatpush.bf16.xpose.msra.mxu0 0
      %690 = vmatpush.bf16.xpose.msra.mxu0 0
      %691 = vmatpush.bf16.xpose.msra.mxu0 %v682
      %692 = vmatmul.bf16.gmra.mxu0 %v679
      %v693 = vpop.f32.mrf.mxu0
      %v694 = vadd.f32 0.0, %v693
      %v695 = vpop.f32.mrf.mxu0
      %696 = vdwg.mxu0
      %v698 = vsel %vm411, %v266, 0
      %v701 = vsel %vm411, %v322, 0
      %703 = vmatpush.bf16.xpose.msra.mxu0 0
      %704 = vmatpush.bf16.xpose.msra.mxu0 0
      %705 = vmatpush.bf16.xpose.msra.mxu0 0
      %706 = vmatpush.bf16.xpose.msra.mxu0 0
      %707 = vmatpush.bf16.xpose.msra.mxu0 0
      %708 = vmatpush.bf16.xpose.msra.mxu0 0
      %709 = vmatpush.bf16.xpose.msra.mxu0 0
      %710 = vmatpush.bf16.xpose.msra.mxu0 %v701
      %711 = vmatmul.bf16.gmra.mxu0 %v698
      %v712 = vpop.f32.mrf.mxu0
      %v713 = vadd.f32 0.0, %v712
      %v714 = vpop.f32.mrf.mxu0
      %715 = vdwg.mxu0
      %v717 = vsel %vm411, %v268, 0
      %v720 = vsel %vm411, %v324, 0
      %722 = vmatpush.bf16.xpose.msra.mxu0 0
      %723 = vmatpush.bf16.xpose.msra.mxu0 0
      %724 = vmatpush.bf16.xpose.msra.mxu0 0
      %725 = vmatpush.bf16.xpose.msra.mxu0 0
      %726 = vmatpush.bf16.xpose.msra.mxu0 0
      %727 = vmatpush.bf16.xpose.msra.mxu0 0
      %728 = vmatpush.bf16.xpose.msra.mxu0 0
      %729 = vmatpush.bf16.xpose.msra.mxu0 %v720
      %730 = vmatmul.bf16.gmra.mxu0 %v717
      %v731 = vpop.f32.mrf.mxu0
      %v732 = vadd.f32 0.0, %v731
      %v733 = vpop.f32.mrf.mxu0
      %734 = vdwg.mxu0
      %v736 = vsel %vm411, %v270, 0
      %v739 = vsel %vm411, %v326, 0
      %741 = vmatpush.bf16.xpose.msra.mxu0 0
      %742 = vmatpush.bf16.xpose.msra.mxu0 0
      %743 = vmatpush.bf16.xpose.msra.mxu0 0
      %744 = vmatpush.bf16.xpose.msra.mxu0 0
      %745 = vmatpush.bf16.xpose.msra.mxu0 0
      %746 = vmatpush.bf16.xpose.msra.mxu0 0
      %747 = vmatpush.bf16.xpose.msra.mxu0 0
      %748 = vmatpush.bf16.xpose.msra.mxu0 %v739
      %749 = vmatmul.bf16.gmra.mxu0 %v736
      %v750 = vpop.f32.mrf.mxu0
      %v751 = vadd.f32 0.0, %v750
      %v752 = vpop.f32.mrf.mxu0
      %753 = vdwg.mxu0
      %v755 = vsel %vm411, %v272, 0
      %v758 = vsel %vm411, %v328, 0
      %760 = vmatpush.bf16.xpose.msra.mxu0 0
      %761 = vmatpush.bf16.xpose.msra.mxu0 0
      %762 = vmatpush.bf16.xpose.msra.mxu0 0
      %763 = vmatpush.bf16.xpose.msra.mxu0 0
      %764 = vmatpush.bf16.xpose.msra.mxu0 0
      %765 = vmatpush.bf16.xpose.msra.mxu0 0
      %766 = vmatpush.bf16.xpose.msra.mxu0 0
      %767 = vmatpush.bf16.xpose.msra.mxu0 %v758
      %768 = vmatmul.bf16.gmra.mxu0 %v755
      %v769 = vpop.f32.mrf.mxu0
      %v770 = vadd.f32 0.0, %v769
      %v771 = vpop.f32.mrf.mxu0
      %772 = vdwg.mxu0
      %v774 = vsel %vm411, %v274, 0
      %v777 = vsel %vm411, %v330, 0
      %779 = vmatpush.bf16.xpose.msra.mxu0 0
      %780 = vmatpush.bf16.xpose.msra.mxu0 0
      %781 = vmatpush.bf16.xpose.msra.mxu0 0
      %782 = vmatpush.bf16.xpose.msra.mxu0 0
      %783 = vmatpush.bf16.xpose.msra.mxu0 0
      %784 = vmatpush.bf16.xpose.msra.mxu0 0
      %785 = vmatpush.bf16.xpose.msra.mxu0 0
      %786 = vmatpush.bf16.xpose.msra.mxu0 %v777
      %787 = vmatmul.bf16.gmra.mxu0 %v774
      %v788 = vpop.f32.mrf.mxu0
      %v789 = vadd.f32 0.0, %v788
      %v790 = vpop.f32.mrf.mxu0
      %791 = vdwg.mxu0
      %v793 = vsel %vm411, %v276, 0
      %v796 = vsel %vm411, %v332, 0
      %798 = vmatpush.bf16.xpose.msra.mxu0 0
      %799 = vmatpush.bf16.xpose.msra.mxu0 0
      %800 = vmatpush.bf16.xpose.msra.mxu0 0
      %801 = vmatpush.bf16.xpose.msra.mxu0 0
      %802 = vmatpush.bf16.xpose.msra.mxu0 0
      %803 = vmatpush.bf16.xpose.msra.mxu0 0
      %804 = vmatpush.bf16.xpose.msra.mxu0 0
      %805 = vmatpush.bf16.xpose.msra.mxu0 %v796
      %806 = vmatmul.bf16.gmra.mxu0 %v793
      %v807 = vpop.f32.mrf.mxu0
      %v808 = vadd.f32 0.0, %v807
      %v809 = vpop.f32.mrf.mxu0
      %810 = vdwg.mxu0
      %v812 = vsel %vm411, %v278, 0
      %v815 = vsel %vm411, %v334, 0
      %817 = vmatpush.bf16.xpose.msra.mxu0 0
      %818 = vmatpush.bf16.xpose.msra.mxu0 0
      %819 = vmatpush.bf16.xpose.msra.mxu0 0
      %820 = vmatpush.bf16.xpose.msra.mxu0 0
      %821 = vmatpush.bf16.xpose.msra.mxu0 0
      %822 = vmatpush.bf16.xpose.msra.mxu0 0
      %823 = vmatpush.bf16.xpose.msra.mxu0 0
      %824 = vmatpush.bf16.xpose.msra.mxu0 %v815
      %825 = vmatmul.bf16.gmra.mxu0 %v812
      %v826 = vpop.f32.mrf.mxu0
      %v827 = vadd.f32 0.0, %v826
      %v828 = vpop.f32.mrf.mxu0
      %829 = vdwg.mxu0
      %v831 = vsel %vm411, %v280, 0
      %v834 = vsel %vm411, %v336, 0
      %836 = vmatpush.bf16.xpose.msra.mxu0 0
      %837 = vmatpush.bf16.xpose.msra.mxu0 0
      %838 = vmatpush.bf16.xpose.msra.mxu0 0
      %839 = vmatpush.bf16.xpose.msra.mxu0 0
      %840 = vmatpush.bf16.xpose.msra.mxu0 0
      %841 = vmatpush.bf16.xpose.msra.mxu0 0
      %842 = vmatpush.bf16.xpose.msra.mxu0 0
      %843 = vmatpush.bf16.xpose.msra.mxu0 %v834
      %844 = vmatmul.bf16.gmra.mxu0 %v831
      %v845 = vpop.f32.mrf.mxu0
      %v846 = vadd.f32 0.0, %v845
      %v847 = vpop.f32.mrf.mxu0
      %848 = vdwg.mxu0
      %v850 = vsel %vm411, %v282, 0
      %v853 = vsel %vm411, %v338, 0
      %855 = vmatpush.bf16.xpose.msra.mxu0 0
      %856 = vmatpush.bf16.xpose.msra.mxu0 0
      %857 = vmatpush.bf16.xpose.msra.mxu0 0
      %858 = vmatpush.bf16.xpose.msra.mxu0 0
      %859 = vmatpush.bf16.xpose.msra.mxu0 0
      %860 = vmatpush.bf16.xpose.msra.mxu0 0
      %861 = vmatpush.bf16.xpose.msra.mxu0 0
      %862 = vmatpush.bf16.xpose.msra.mxu0 %v853
      %863 = vmatmul.bf16.gmra.mxu0 %v850
      %v864 = vpop.f32.mrf.mxu0
      %v865 = vadd.f32 0.0, %v864
      %v866 = vpop.f32.mrf.mxu0
      %867 = vdwg.mxu0
      %v869 = vsel %vm411, %v284, 0
      %v872 = vsel %vm411, %v340, 0
      %874 = vmatpush.bf16.xpose.msra.mxu0 0
      %875 = vmatpush.bf16.xpose.msra.mxu0 0
      %876 = vmatpush.bf16.xpose.msra.mxu0 0
      %877 = vmatpush.bf16.xpose.msra.mxu0 0
      %878 = vmatpush.bf16.xpose.msra.mxu0 0
      %879 = vmatpush.bf16.xpose.msra.mxu0 0
      %880 = vmatpush.bf16.xpose.msra.mxu0 0
      %881 = vmatpush.bf16.xpose.msra.mxu0 %v872
      %882 = vmatmul.bf16.gmra.mxu0 %v869
      %v883 = vpop.f32.mrf.mxu0
      %v884 = vadd.f32 0.0, %v883
      %v885 = vpop.f32.mrf.mxu0
      %886 = vdwg.mxu0
      %v888 = vsel %vm411, %v286, 0
      %v891 = vsel %vm411, %v342, 0
      %893 = vmatpush.bf16.xpose.msra.mxu0 0
      %894 = vmatpush.bf16.xpose.msra.mxu0 0
      %895 = vmatpush.bf16.xpose.msra.mxu0 0
      %896 = vmatpush.bf16.xpose.msra.mxu0 0
      %897 = vmatpush.bf16.xpose.msra.mxu0 0
      %898 = vmatpush.bf16.xpose.msra.mxu0 0
      %899 = vmatpush.bf16.xpose.msra.mxu0 0
      %900 = vmatpush.bf16.xpose.msra.mxu0 %v891
      %901 = vmatmul.bf16.gmra.mxu0 %v888
      %v902 = vpop.f32.mrf.mxu0
      %v903 = vadd.f32 0.0, %v902
      %v904 = vpop.f32.mrf.mxu0
      %905 = vdwg.mxu0
      %v907 = vsel %vm411, %v288, 0
      %v910 = vsel %vm411, %v344, 0
      %912 = vmatpush.bf16.xpose.msra.mxu0 0
      %913 = vmatpush.bf16.xpose.msra.mxu0 0
      %914 = vmatpush.bf16.xpose.msra.mxu0 0
      %915 = vmatpush.bf16.xpose.msra.mxu0 0
      %916 = vmatpush.bf16.xpose.msra.mxu0 0
      %917 = vmatpush.bf16.xpose.msra.mxu0 0
      %918 = vmatpush.bf16.xpose.msra.mxu0 0
      %919 = vmatpush.bf16.xpose.msra.mxu0 %v910
      %920 = vmatmul.bf16.gmra.mxu0 %v907
      %v921 = vpop.f32.mrf.mxu0
      %v922 = vadd.f32 0.0, %v921
      %v923 = vpop.f32.mrf.mxu0
      %924 = vdwg.mxu0
      %v926 = vsel %vm411, %v290, 0
      %v929 = vsel %vm411, %v346, 0
      %931 = vmatpush.bf16.xpose.msra.mxu0 0
      %932 = vmatpush.bf16.xpose.msra.mxu0 0
      %933 = vmatpush.bf16.xpose.msra.mxu0 0
      %934 = vmatpush.bf16.xpose.msra.mxu0 0
      %935 = vmatpush.bf16.xpose.msra.mxu0 0
      %936 = vmatpush.bf16.xpose.msra.mxu0 0
      %937 = vmatpush.bf16.xpose.msra.mxu0 0
      %938 = vmatpush.bf16.xpose.msra.mxu0 %v929
      %939 = vmatmul.bf16.gmra.mxu0 %v926
      %v940 = vpop.f32.mrf.mxu0
      %v941 = vadd.f32 0.0, %v940
      %v942 = vpop.f32.mrf.mxu0
      %943 = vdwg.mxu0
      %v945 = vsel %vm411, %v292, 0
      %v948 = vsel %vm411, %v348, 0
      %950 = vmatpush.bf16.xpose.msra.mxu0 0
      %951 = vmatpush.bf16.xpose.msra.mxu0 0
      %952 = vmatpush.bf16.xpose.msra.mxu0 0
      %953 = vmatpush.bf16.xpose.msra.mxu0 0
      %954 = vmatpush.bf16.xpose.msra.mxu0 0
      %955 = vmatpush.bf16.xpose.msra.mxu0 0
      %956 = vmatpush.bf16.xpose.msra.mxu0 0
      %957 = vmatpush.bf16.xpose.msra.mxu0 %v948
      %958 = vmatmul.bf16.gmra.mxu0 %v945
      %v959 = vpop.f32.mrf.mxu0
      %v960 = vadd.f32 0.0, %v959
      %v961 = vpop.f32.mrf.mxu0
      %962 = vdwg.mxu0
      %v964 = vsel %vm411, %v294, 0
      %v967 = vsel %vm411, %v350, 0
      %969 = vmatpush.bf16.xpose.msra.mxu0 0
      %970 = vmatpush.bf16.xpose.msra.mxu0 0
      %971 = vmatpush.bf16.xpose.msra.mxu0 0
      %972 = vmatpush.bf16.xpose.msra.mxu0 0
      %973 = vmatpush.bf16.xpose.msra.mxu0 0
      %974 = vmatpush.bf16.xpose.msra.mxu0 0
      %975 = vmatpush.bf16.xpose.msra.mxu0 0
      %976 = vmatpush.bf16.xpose.msra.mxu0 %v967
      %977 = vmatmul.bf16.gmra.mxu0 %v964
      %v978 = vpop.f32.mrf.mxu0
      %v979 = vadd.f32 0.0, %v978
      %v980 = vpop.f32.mrf.mxu0
      %981 = vdwg.mxu0
      %v983 = vsel %vm411, %v296, 0
      %v986 = vsel %vm411, %v352, 0
      %988 = vmatpush.bf16.xpose.msra.mxu0 0
      %989 = vmatpush.bf16.xpose.msra.mxu0 0
      %990 = vmatpush.bf16.xpose.msra.mxu0 0
      %991 = vmatpush.bf16.xpose.msra.mxu0 0
      %992 = vmatpush.bf16.xpose.msra.mxu0 0
      %993 = vmatpush.bf16.xpose.msra.mxu0 0
      %994 = vmatpush.bf16.xpose.msra.mxu0 0
      %995 = vmatpush.bf16.xpose.msra.mxu0 %v986
      %996 = vmatmul.bf16.gmra.mxu0 %v983
      %v997 = vpop.f32.mrf.mxu0
      %v998 = vadd.f32 0.0, %v997
      %v999 = vpop.f32.mrf.mxu0
      %1000 = vdwg.mxu0
      %v1002 = vsel %vm411, %v298, 0
      %v1005 = vsel %vm411, %v354, 0
      %1007 = vmatpush.bf16.xpose.msra.mxu0 0
      %1008 = vmatpush.bf16.xpose.msra.mxu0 0
      %1009 = vmatpush.bf16.xpose.msra.mxu0 0
      %1010 = vmatpush.bf16.xpose.msra.mxu0 0
      %1011 = vmatpush.bf16.xpose.msra.mxu0 0
      %1012 = vmatpush.bf16.xpose.msra.mxu0 0
      %1013 = vmatpush.bf16.xpose.msra.mxu0 0
      %1014 = vmatpush.bf16.xpose.msra.mxu0 %v1005
      %1015 = vmatmul.bf16.gmra.mxu0 %v1002
      %v1016 = vpop.f32.mrf.mxu0
      %v1017 = vadd.f32 0.0, %v1016
      %v1018 = vpop.f32.mrf.mxu0
      %1019 = vdwg.mxu0
      %v1020 = vsel %vm411, %v428, -inf
      %1021 = vmax.xlane.f32.xlu0 %v1020
      %v1022 = vpop.xlane.xlu0 %1021
      %v1023 = vsel %vm411, %v447, -inf
      %1024 = vmax.xlane.f32.xlu0 %v1023
      %v1025 = vpop.xlane.xlu0 %1024
      %v1026 = vsel %vm411, %v466, -inf
      %1027 = vmax.xlane.f32.xlu0 %v1026
      %v1028 = vpop.xlane.xlu0 %1027
      %v1029 = vsel %vm411, %v485, -inf
      %1030 = vmax.xlane.f32.xlu0 %v1029
      %v1031 = vpop.xlane.xlu0 %1030
      %v1032 = vsel %vm411, %v504, -inf
      %1033 = vmax.xlane.f32.xlu0 %v1032
      %v1034 = vpop.xlane.xlu0 %1033
      %v1035 = vsel %vm411, %v523, -inf
      %1036 = vmax.xlane.f32.xlu0 %v1035
      %v1037 = vpop.xlane.xlu0 %1036
      %v1038 = vsel %vm411, %v542, -inf
      %1039 = vmax.xlane.f32.xlu0 %v1038
      %v1040 = vpop.xlane.xlu0 %1039
      %v1041 = vsel %vm411, %v561, -inf
      %1042 = vmax.xlane.f32.xlu0 %v1041
      %v1043 = vpop.xlane.xlu0 %1042
      %v1044 = vsel %vm411, %v580, -inf
      %1045 = vmax.xlane.f32.xlu0 %v1044
      %v1046 = vpop.xlane.xlu0 %1045
      %v1047 = vsel %vm411, %v599, -inf
      %1048 = vmax.xlane.f32.xlu0 %v1047
      %v1049 = vpop.xlane.xlu0 %1048
      %v1050 = vsel %vm411, %v618, -inf
      %1051 = vmax.xlane.f32.xlu0 %v1050
      %v1052 = vpop.xlane.xlu0 %1051
      %v1053 = vsel %vm411, %v637, -inf
      %1054 = vmax.xlane.f32.xlu0 %v1053
      %v1055 = vpop.xlane.xlu0 %1054
      %v1056 = vsel %vm411, %v656, -inf
      %1057 = vmax.xlane.f32.xlu0 %v1056
      %v1058 = vpop.xlane.xlu0 %1057
      %v1059 = vsel %vm411, %v675, -inf
      %1060 = vmax.xlane.f32.xlu0 %v1059
      %v1061 = vpop.xlane.xlu0 %1060
      %v1062 = vsel %vm411, %v694, -inf
      %1063 = vmax.xlane.f32.xlu0 %v1062
      %v1064 = vpop.xlane.xlu0 %1063
      %v1065 = vsel %vm411, %v713, -inf
      %1066 = vmax.xlane.f32.xlu0 %v1065
      %v1067 = vpop.xlane.xlu0 %1066
      %v1068 = vsel %vm411, %v732, -inf
      %1069 = vmax.xlane.f32.xlu0 %v1068
      %v1070 = vpop.xlane.xlu0 %1069
      %v1071 = vsel %vm411, %v751, -inf
      %1072 = vmax.xlane.f32.xlu0 %v1071
      %v1073 = vpop.xlane.xlu0 %1072
      %v1074 = vsel %vm411, %v770, -inf
      %1075 = vmax.xlane.f32.xlu0 %v1074
      %v1076 = vpop.xlane.xlu0 %1075
      %v1077 = vsel %vm411, %v789, -inf
      %1078 = vmax.xlane.f32.xlu0 %v1077
      %v1079 = vpop.xlane.xlu0 %1078
      %v1080 = vsel %vm411, %v808, -inf
      %1081 = vmax.xlane.f32.xlu0 %v1080
      %v1082 = vpop.xlane.xlu0 %1081
      %v1083 = vsel %vm411, %v827, -inf
      %1084 = vmax.xlane.f32.xlu0 %v1083
      %v1085 = vpop.xlane.xlu0 %1084
      %v1086 = vsel %vm411, %v846, -inf
      %1087 = vmax.xlane.f32.xlu0 %v1086
      %v1088 = vpop.xlane.xlu0 %1087
      %v1089 = vsel %vm411, %v865, -inf
      %1090 = vmax.xlane.f32.xlu0 %v1089
      %v1091 = vpop.xlane.xlu0 %1090
      %v1092 = vsel %vm411, %v884, -inf
      %1093 = vmax.xlane.f32.xlu0 %v1092
      %v1094 = vpop.xlane.xlu0 %1093
      %v1095 = vsel %vm411, %v903, -inf
      %1096 = vmax.xlane.f32.xlu0 %v1095
      %v1097 = vpop.xlane.xlu0 %1096
      %v1098 = vsel %vm411, %v922, -inf
      %1099 = vmax.xlane.f32.xlu0 %v1098
      %v1100 = vpop.xlane.xlu0 %1099
      %v1101 = vsel %vm411, %v941, -inf
      %1102 = vmax.xlane.f32.xlu0 %v1101
      %v1103 = vpop.xlane.xlu0 %1102
      %v1104 = vsel %vm411, %v960, -inf
      %1105 = vmax.xlane.f32.xlu0 %v1104
      %v1106 = vpop.xlane.xlu0 %1105
      %v1107 = vsel %vm411, %v979, -inf
      %1108 = vmax.xlane.f32.xlu0 %v1107
      %v1109 = vpop.xlane.xlu0 %1108
      %v1110 = vsel %vm411, %v998, -inf
      %1111 = vmax.xlane.f32.xlu0 %v1110
      %v1112 = vpop.xlane.xlu0 %1111
      %v1113 = vsel %vm411, %v1017, -inf
      %1114 = vmax.xlane.f32.xlu0 %v1113
      %v1115 = vpop.xlane.xlu0 %1114
      %v1116 = vsub.f32 %v428, %v1022
      %v1117 = vsub.f32 %v447, %v1025
      %v1118 = vsub.f32 %v466, %v1028
      %v1119 = vsub.f32 %v485, %v1031
      %v1120 = vsub.f32 %v504, %v1034
      %v1121 = vsub.f32 %v523, %v1037
      %v1122 = vsub.f32 %v542, %v1040
      %v1123 = vsub.f32 %v561, %v1043
      %v1124 = vsub.f32 %v580, %v1046
      %v1125 = vsub.f32 %v599, %v1049
      %v1126 = vsub.f32 %v618, %v1052
      %v1127 = vsub.f32 %v637, %v1055
      %v1128 = vsub.f32 %v656, %v1058
      %v1129 = vsub.f32 %v675, %v1061
      %v1130 = vsub.f32 %v694, %v1064
      %v1131 = vsub.f32 %v713, %v1067
      %v1132 = vsub.f32 %v732, %v1070
      %v1133 = vsub.f32 %v751, %v1073
      %v1134 = vsub.f32 %v770, %v1076
      %v1135 = vsub.f32 %v789, %v1079
      %v1136 = vsub.f32 %v808, %v1082
      %v1137 = vsub.f32 %v827, %v1085
      %v1138 = vsub.f32 %v846, %v1088
      %v1139 = vsub.f32 %v865, %v1091
      %v1140 = vsub.f32 %v884, %v1094
      %v1141 = vsub.f32 %v903, %v1097
      %v1142 = vsub.f32 %v922, %v1100
      %v1143 = vsub.f32 %v941, %v1103
      %v1144 = vsub.f32 %v960, %v1106
      %v1145 = vsub.f32 %v979, %v1109
      %v1146 = vsub.f32 %v998, %v1112
      %v1147 = vsub.f32 %v1017, %v1115
      %v1148 = vmul.f32 %v1116, 1.442695
      %v1149 = vpow.pop %v1148
      %v1150 = vmul.f32 %v1117, 1.442695
      %v1151 = vpow.pop %v1150
      %v1152 = vmul.f32 %v1118, 1.442695
      %v1153 = vpow.pop %v1152
      %v1154 = vmul.f32 %v1119, 1.442695
      %v1155 = vpow.pop %v1154
      %v1156 = vmul.f32 %v1120, 1.442695
      %v1157 = vpow.pop %v1156
      %v1158 = vmul.f32 %v1121, 1.442695
      %v1159 = vpow.pop %v1158
      %v1160 = vmul.f32 %v1122, 1.442695
      %v1161 = vpow.pop %v1160
      %v1162 = vmul.f32 %v1123, 1.442695
      %v1163 = vpow.pop %v1162
      %v1164 = vmul.f32 %v1124, 1.442695
      %v1165 = vpow.pop %v1164
      %v1166 = vmul.f32 %v1125, 1.442695
      %v1167 = vpow.pop %v1166
      %v1168 = vmul.f32 %v1126, 1.442695
      %v1169 = vpow.pop %v1168
      %v1170 = vmul.f32 %v1127, 1.442695
      %v1171 = vpow.pop %v1170
      %v1172 = vmul.f32 %v1128, 1.442695
      %v1173 = vpow.pop %v1172
      %v1174 = vmul.f32 %v1129, 1.442695
      %v1175 = vpow.pop %v1174
      %v1176 = vmul.f32 %v1130, 1.442695
      %v1177 = vpow.pop %v1176
      %v1178 = vmul.f32 %v1131, 1.442695
      %v1179 = vpow.pop %v1178
      %v1180 = vmul.f32 %v1132, 1.442695
      %v1181 = vpow.pop %v1180
      %v1182 = vmul.f32 %v1133, 1.442695
      %v1183 = vpow.pop %v1182
      %v1184 = vmul.f32 %v1134, 1.442695
      %v1185 = vpow.pop %v1184
      %v1186 = vmul.f32 %v1135, 1.442695
      %v1187 = vpow.pop %v1186
      %v1188 = vmul.f32 %v1136, 1.442695
      %v1189 = vpow.pop %v1188
      %v1190 = vmul.f32 %v1137, 1.442695
      %v1191 = vpow.pop %v1190
      %v1192 = vmul.f32 %v1138, 1.442695
      %v1193 = vpow.pop %v1192
      %v1194 = vmul.f32 %v1139, 1.442695
      %v1195 = vpow.pop %v1194
      %v1196 = vmul.f32 %v1140, 1.442695
      %v1197 = vpow.pop %v1196
      %v1198 = vmul.f32 %v1141, 1.442695
      %v1199 = vpow.pop %v1198
      %v1200 = vmul.f32 %v1142, 1.442695
      %v1201 = vpow.pop %v1200
      %v1202 = vmul.f32 %v1143, 1.442695
      %v1203 = vpow.pop %v1202
      %v1204 = vmul.f32 %v1144, 1.442695
      %v1205 = vpow.pop %v1204
      %v1206 = vmul.f32 %v1145, 1.442695
      %v1207 = vpow.pop %v1206
      %v1208 = vmul.f32 %v1146, 1.442695
      %v1209 = vpow.pop %v1208
      %v1210 = vmul.f32 %v1147, 1.442695
      %v1211 = vpow.pop %v1210
      %v1212 = vsel %vm411, %v1149, 0.0
      %1213 = vadd.xlane.f32.xlu0 %v1212
      %v1214 = vpop.xlane.xlu0 %1213
      %v1215 = vsel %vm411, %v1151, 0.0
      %1216 = vadd.xlane.f32.xlu0 %v1215
      %v1217 = vpop.xlane.xlu0 %1216
      %v1218 = vsel %vm411, %v1153, 0.0
      %1219 = vadd.xlane.f32.xlu0 %v1218
      %v1220 = vpop.xlane.xlu0 %1219
      %v1221 = vsel %vm411, %v1155, 0.0
      %1222 = vadd.xlane.f32.xlu0 %v1221
      %v1223 = vpop.xlane.xlu0 %1222
      %v1224 = vsel %vm411, %v1157, 0.0
      %1225 = vadd.xlane.f32.xlu0 %v1224
      %v1226 = vpop.xlane.xlu0 %1225
      %v1227 = vsel %vm411, %v1159, 0.0
      %1228 = vadd.xlane.f32.xlu0 %v1227
      %v1229 = vpop.xlane.xlu0 %1228
      %v1230 = vsel %vm411, %v1161, 0.0
      %1231 = vadd.xlane.f32.xlu0 %v1230
      %v1232 = vpop.xlane.xlu0 %1231
      %v1233 = vsel %vm411, %v1163, 0.0
      %1234 = vadd.xlane.f32.xlu0 %v1233
      %v1235 = vpop.xlane.xlu0 %1234
      %v1236 = vsel %vm411, %v1165, 0.0
      %1237 = vadd.xlane.f32.xlu0 %v1236
      %v1238 = vpop.xlane.xlu0 %1237
      %v1239 = vsel %vm411, %v1167, 0.0
      %1240 = vadd.xlane.f32.xlu0 %v1239
      %v1241 = vpop.xlane.xlu0 %1240
      %v1242 = vsel %vm411, %v1169, 0.0
      %1243 = vadd.xlane.f32.xlu0 %v1242
      %v1244 = vpop.xlane.xlu0 %1243
      %v1245 = vsel %vm411, %v1171, 0.0
      %1246 = vadd.xlane.f32.xlu0 %v1245
      %v1247 = vpop.xlane.xlu0 %1246
      %v1248 = vsel %vm411, %v1173, 0.0
      %1249 = vadd.xlane.f32.xlu0 %v1248
      %v1250 = vpop.xlane.xlu0 %1249
      %v1251 = vsel %vm411, %v1175, 0.0
      %1252 = vadd.xlane.f32.xlu0 %v1251
      %v1253 = vpop.xlane.xlu0 %1252
      %v1254 = vsel %vm411, %v1177, 0.0
      %1255 = vadd.xlane.f32.xlu0 %v1254
      %v1256 = vpop.xlane.xlu0 %1255
      %v1257 = vsel %vm411, %v1179, 0.0
      %1258 = vadd.xlane.f32.xlu0 %v1257
      %v1259 = vpop.xlane.xlu0 %1258
      %v1260 = vsel %vm411, %v1181, 0.0
      %1261 = vadd.xlane.f32.xlu0 %v1260
      %v1262 = vpop.xlane.xlu0 %1261
      %v1263 = vsel %vm411, %v1183, 0.0
      %1264 = vadd.xlane.f32.xlu0 %v1263
      %v1265 = vpop.xlane.xlu0 %1264
      %v1266 = vsel %vm411, %v1185, 0.0
      %1267 = vadd.xlane.f32.xlu0 %v1266
      %v1268 = vpop.xlane.xlu0 %1267
      %v1269 = vsel %vm411, %v1187, 0.0
      %1270 = vadd.xlane.f32.xlu0 %v1269
      %v1271 = vpop.xlane.xlu0 %1270
      %v1272 = vsel %vm411, %v1189, 0.0
      %1273 = vadd.xlane.f32.xlu0 %v1272
      %v1274 = vpop.xlane.xlu0 %1273
      %v1275 = vsel %vm411, %v1191, 0.0
      %1276 = vadd.xlane.f32.xlu0 %v1275
      %v1277 = vpop.xlane.xlu0 %1276
      %v1278 = vsel %vm411, %v1193, 0.0
      %1279 = vadd.xlane.f32.xlu0 %v1278
      %v1280 = vpop.xlane.xlu0 %1279
      %v1281 = vsel %vm411, %v1195, 0.0
      %1282 = vadd.xlane.f32.xlu0 %v1281
      %v1283 = vpop.xlane.xlu0 %1282
      %v1284 = vsel %vm411, %v1197, 0.0
      %1285 = vadd.xlane.f32.xlu0 %v1284
      %v1286 = vpop.xlane.xlu0 %1285
      %v1287 = vsel %vm411, %v1199, 0.0
      %1288 = vadd.xlane.f32.xlu0 %v1287
      %v1289 = vpop.xlane.xlu0 %1288
      %v1290 = vsel %vm411, %v1201, 0.0
      %1291 = vadd.xlane.f32.xlu0 %v1290
      %v1292 = vpop.xlane.xlu0 %1291
      %v1293 = vsel %vm411, %v1203, 0.0
      %1294 = vadd.xlane.f32.xlu0 %v1293
      %v1295 = vpop.xlane.xlu0 %1294
      %v1296 = vsel %vm411, %v1205, 0.0
      %1297 = vadd.xlane.f32.xlu0 %v1296
      %v1298 = vpop.xlane.xlu0 %1297
      %v1299 = vsel %vm411, %v1207, 0.0
      %1300 = vadd.xlane.f32.xlu0 %v1299
      %v1301 = vpop.xlane.xlu0 %1300
      %v1302 = vsel %vm411, %v1209, 0.0
      %1303 = vadd.xlane.f32.xlu0 %v1302
      %v1304 = vpop.xlane.xlu0 %1303
      %v1305 = vsel %vm411, %v1211, 0.0
      %1306 = vadd.xlane.f32.xlu0 %v1305
      %v1307 = vpop.xlane.xlu0 %1306
      %v1308 = vrcp.pop %v1214
      %v1309 = vrcp.pop %v1217
      %v1310 = vrcp.pop %v1220
      %v1311 = vrcp.pop %v1223
      %v1312 = vrcp.pop %v1226
      %v1313 = vrcp.pop %v1229
      %v1314 = vrcp.pop %v1232
      %v1315 = vrcp.pop %v1235
      %v1316 = vrcp.pop %v1238
      %v1317 = vrcp.pop %v1241
      %v1318 = vrcp.pop %v1244
      %v1319 = vrcp.pop %v1247
      %v1320 = vrcp.pop %v1250
      %v1321 = vrcp.pop %v1253
      %v1322 = vrcp.pop %v1256
      %v1323 = vrcp.pop %v1259
      %v1324 = vrcp.pop %v1262
      %v1325 = vrcp.pop %v1265
      %v1326 = vrcp.pop %v1268
      %v1327 = vrcp.pop %v1271
      %v1328 = vrcp.pop %v1274
      %v1329 = vrcp.pop %v1277
      %v1330 = vrcp.pop %v1280
      %v1331 = vrcp.pop %v1283
      %v1332 = vrcp.pop %v1286
      %v1333 = vrcp.pop %v1289
      %v1334 = vrcp.pop %v1292
      %v1335 = vrcp.pop %v1295
      %v1336 = vrcp.pop %v1298
      %v1337 = vrcp.pop %v1301
      %v1338 = vrcp.pop %v1304
      %v1339 = vrcp.pop %v1307
      %v1340 = vmul.f32 %v1149, %v1308
      %v1341 = vmul.f32 %v1151, %v1309
      %v1342 = vmul.f32 %v1153, %v1310
      %v1343 = vmul.f32 %v1155, %v1311
      %v1344 = vmul.f32 %v1157, %v1312
      %v1345 = vmul.f32 %v1159, %v1313
      %v1346 = vmul.f32 %v1161, %v1314
      %v1347 = vmul.f32 %v1163, %v1315
      %v1348 = vmul.f32 %v1165, %v1316
      %v1349 = vmul.f32 %v1167, %v1317
      %v1350 = vmul.f32 %v1169, %v1318
      %v1351 = vmul.f32 %v1171, %v1319
      %v1352 = vmul.f32 %v1173, %v1320
      %v1353 = vmul.f32 %v1175, %v1321
      %v1354 = vmul.f32 %v1177, %v1322
      %v1355 = vmul.f32 %v1179, %v1323
      %v1356 = vmul.f32 %v1181, %v1324
      %v1357 = vmul.f32 %v1183, %v1325
      %v1358 = vmul.f32 %v1185, %v1326
      %v1359 = vmul.f32 %v1187, %v1327
      %v1360 = vmul.f32 %v1189, %v1328
      %v1361 = vmul.f32 %v1191, %v1329
      %v1362 = vmul.f32 %v1193, %v1330
      %v1363 = vmul.f32 %v1195, %v1331
      %v1364 = vmul.f32 %v1197, %v1332
      %v1365 = vmul.f32 %v1199, %v1333
      %v1366 = vmul.f32 %v1201, %v1334
      %v1367 = vmul.f32 %v1203, %v1335
      %v1368 = vmul.f32 %v1205, %v1336
      %v1369 = vmul.f32 %v1207, %v1337
      %v1370 = vmul.f32 %v1209, %v1338
      %v1371 = vmul.f32 %v1211, %v1339
      %v1372 = vpack.c.bf16 %v1340, %v1340
      %v1373 = vpack.c.bf16 %v1341, %v1341
      %v1374 = vpack.c.bf16 %v1342, %v1342
      %v1375 = vpack.c.bf16 %v1343, %v1343
      %v1376 = vpack.c.bf16 %v1344, %v1344
      %v1377 = vpack.c.bf16 %v1345, %v1345
      %v1378 = vpack.c.bf16 %v1346, %v1346
      %v1379 = vpack.c.bf16 %v1347, %v1347
      %v1380 = vpack.c.bf16 %v1348, %v1348
      %v1381 = vpack.c.bf16 %v1349, %v1349
      %v1382 = vpack.c.bf16 %v1350, %v1350
      %v1383 = vpack.c.bf16 %v1351, %v1351
      %v1384 = vpack.c.bf16 %v1352, %v1352
      %v1385 = vpack.c.bf16 %v1353, %v1353
      %v1386 = vpack.c.bf16 %v1354, %v1354
      %v1387 = vpack.c.bf16 %v1355, %v1355
      %v1388 = vpack.c.bf16 %v1356, %v1356
      %v1389 = vpack.c.bf16 %v1357, %v1357
      %v1390 = vpack.c.bf16 %v1358, %v1358
      %v1391 = vpack.c.bf16 %v1359, %v1359
      %v1392 = vpack.c.bf16 %v1360, %v1360
      %v1393 = vpack.c.bf16 %v1361, %v1361
      %v1394 = vpack.c.bf16 %v1362, %v1362
      %v1395 = vpack.c.bf16 %v1363, %v1363
      %v1396 = vpack.c.bf16 %v1364, %v1364
      %v1397 = vpack.c.bf16 %v1365, %v1365
      %v1398 = vpack.c.bf16 %v1366, %v1366
      %v1399 = vpack.c.bf16 %v1367, %v1367
      %v1400 = vpack.c.bf16 %v1368, %v1368
      %v1401 = vpack.c.bf16 %v1369, %v1369
      %v1402 = vpack.c.bf16 %v1370, %v1370
      %v1403 = vpack.c.bf16 %v1371, %v1371
      %v1405 = vsel %vm411, %v1372, 0
      %vm1407 = vcmask 1043456
      %v1409 = vsel %vm1407, %v235, 0
      %1411 = vmatpush.bf16.msra.mxu0 0
      %1412 = vmatpush.bf16.msra.mxu0 0
      %1413 = vmatpush.bf16.msra.mxu0 0
      %1414 = vmatpush.bf16.msra.mxu0 0
      %1415 = vmatpush.bf16.msra.mxu0 0
      %1416 = vmatpush.bf16.msra.mxu0 0
      %1417 = vmatpush.bf16.msra.mxu0 0
      %1418 = vmatpush.bf16.msra.mxu0 %v1409
      %1419 = vmatmul.bf16.gmra.mxu0 %v1405
      %v1420 = vpop.f32.mrf.mxu0
      %v1421 = vadd.f32 0.0, %v1420
      %v1422 = vpop.f32.mrf.mxu0
      %1423 = vdwg.mxu0
      %v1425 = vsel %vm411, %v1373, 0
      %v1428 = vsel %vm1407, %v236, 0
      %1430 = vmatpush.bf16.msra.mxu0 0
      %1431 = vmatpush.bf16.msra.mxu0 0
      %1432 = vmatpush.bf16.msra.mxu0 0
      %1433 = vmatpush.bf16.msra.mxu0 0
      %1434 = vmatpush.bf16.msra.mxu0 0
      %1435 = vmatpush.bf16.msra.mxu0 0
      %1436 = vmatpush.bf16.msra.mxu0 0
      %1437 = vmatpush.bf16.msra.mxu0 %v1428
      %1438 = vmatmul.bf16.gmra.mxu0 %v1425
      %v1439 = vpop.f32.mrf.mxu0
      %v1440 = vadd.f32 0.0, %v1439
      %v1441 = vpop.f32.mrf.mxu0
      %1442 = vdwg.mxu0
      %v1444 = vsel %vm411, %v1374, 0
      %v1447 = vsel %vm1407, %v237, 0
      %1449 = vmatpush.bf16.msra.mxu0 0
      %1450 = vmatpush.bf16.msra.mxu0 0
      %1451 = vmatpush.bf16.msra.mxu0 0
      %1452 = vmatpush.bf16.msra.mxu0 0
      %1453 = vmatpush.bf16.msra.mxu0 0
      %1454 = vmatpush.bf16.msra.mxu0 0
      %1455 = vmatpush.bf16.msra.mxu0 0
      %1456 = vmatpush.bf16.msra.mxu0 %v1447
      %1457 = vmatmul.bf16.gmra.mxu0 %v1444
      %v1458 = vpop.f32.mrf.mxu0
      %v1459 = vadd.f32 0.0, %v1458
      %v1460 = vpop.f32.mrf.mxu0
      %1461 = vdwg.mxu0
      %v1463 = vsel %vm411, %v1375, 0
      %v1466 = vsel %vm1407, %v238, 0
      %1468 = vmatpush.bf16.msra.mxu0 0
      %1469 = vmatpush.bf16.msra.mxu0 0
      %1470 = vmatpush.bf16.msra.mxu0 0
      %1471 = vmatpush.bf16.msra.mxu0 0
      %1472 = vmatpush.bf16.msra.mxu0 0
      %1473 = vmatpush.bf16.msra.mxu0 0
      %1474 = vmatpush.bf16.msra.mxu0 0
      %1475 = vmatpush.bf16.msra.mxu0 %v1466
      %1476 = vmatmul.bf16.gmra.mxu0 %v1463
      %v1477 = vpop.f32.mrf.mxu0
      %v1478 = vadd.f32 0.0, %v1477
      %v1479 = vpop.f32.mrf.mxu0
      %1480 = vdwg.mxu0
      %v1482 = vsel %vm411, %v1376, 0
      %v1485 = vsel %vm1407, %v239, 0
      %1487 = vmatpush.bf16.msra.mxu0 0
      %1488 = vmatpush.bf16.msra.mxu0 0
      %1489 = vmatpush.bf16.msra.mxu0 0
      %1490 = vmatpush.bf16.msra.mxu0 0
      %1491 = vmatpush.bf16.msra.mxu0 0
      %1492 = vmatpush.bf16.msra.mxu0 0
      %1493 = vmatpush.bf16.msra.mxu0 0
      %1494 = vmatpush.bf16.msra.mxu0 %v1485
      %1495 = vmatmul.bf16.gmra.mxu0 %v1482
      %v1496 = vpop.f32.mrf.mxu0
      %v1497 = vadd.f32 0.0, %v1496
      %v1498 = vpop.f32.mrf.mxu0
      %1499 = vdwg.mxu0
      %v1501 = vsel %vm411, %v1377, 0
      %v1504 = vsel %vm1407, %v240, 0
      %1506 = vmatpush.bf16.msra.mxu0 0
      %1507 = vmatpush.bf16.msra.mxu0 0
      %1508 = vmatpush.bf16.msra.mxu0 0
      %1509 = vmatpush.bf16.msra.mxu0 0
      %1510 = vmatpush.bf16.msra.mxu0 0
      %1511 = vmatpush.bf16.msra.mxu0 0
      %1512 = vmatpush.bf16.msra.mxu0 0
      %1513 = vmatpush.bf16.msra.mxu0 %v1504
      %1514 = vmatmul.bf16.gmra.mxu0 %v1501
      %v1515 = vpop.f32.mrf.mxu0
      %v1516 = vadd.f32 0.0, %v1515
      %v1517 = vpop.f32.mrf.mxu0
      %1518 = vdwg.mxu0
      %v1520 = vsel %vm411, %v1378, 0
      %v1523 = vsel %vm1407, %v241, 0
      %1525 = vmatpush.bf16.msra.mxu0 0
      %1526 = vmatpush.bf16.msra.mxu0 0
      %1527 = vmatpush.bf16.msra.mxu0 0
      %1528 = vmatpush.bf16.msra.mxu0 0
      %1529 = vmatpush.bf16.msra.mxu0 0
      %1530 = vmatpush.bf16.msra.mxu0 0
      %1531 = vmatpush.bf16.msra.mxu0 0
      %1532 = vmatpush.bf16.msra.mxu0 %v1523
      %1533 = vmatmul.bf16.gmra.mxu0 %v1520
      %v1534 = vpop.f32.mrf.mxu0
      %v1535 = vadd.f32 0.0, %v1534
      %v1536 = vpop.f32.mrf.mxu0
      %1537 = vdwg.mxu0
      %v1539 = vsel %vm411, %v1379, 0
      %v1542 = vsel %vm1407, %v242, 0
      %1544 = vmatpush.bf16.msra.mxu0 0
      %1545 = vmatpush.bf16.msra.mxu0 0
      %1546 = vmatpush.bf16.msra.mxu0 0
      %1547 = vmatpush.bf16.msra.mxu0 0
      %1548 = vmatpush.bf16.msra.mxu0 0
      %1549 = vmatpush.bf16.msra.mxu0 0
      %1550 = vmatpush.bf16.msra.mxu0 0
      %1551 = vmatpush.bf16.msra.mxu0 %v1542
      %1552 = vmatmul.bf16.gmra.mxu0 %v1539
      %v1553 = vpop.f32.mrf.mxu0
      %v1554 = vadd.f32 0.0, %v1553
      %v1555 = vpop.f32.mrf.mxu0
      %1556 = vdwg.mxu0
      %v1558 = vsel %vm411, %v1380, 0
      %v1561 = vsel %vm1407, %v364, 0
      %1563 = vmatpush.bf16.msra.mxu0 0
      %1564 = vmatpush.bf16.msra.mxu0 0
      %1565 = vmatpush.bf16.msra.mxu0 0
      %1566 = vmatpush.bf16.msra.mxu0 0
      %1567 = vmatpush.bf16.msra.mxu0 0
      %1568 = vmatpush.bf16.msra.mxu0 0
      %1569 = vmatpush.bf16.msra.mxu0 0
      %1570 = vmatpush.bf16.msra.mxu0 %v1561
      %1571 = vmatmul.bf16.gmra.mxu0 %v1558
      %v1572 = vpop.f32.mrf.mxu0
      %v1573 = vadd.f32 0.0, %v1572
      %v1574 = vpop.f32.mrf.mxu0
      %1575 = vdwg.mxu0
      %v1577 = vsel %vm411, %v1381, 0
      %v1580 = vsel %vm1407, %v366, 0
      %1582 = vmatpush.bf16.msra.mxu0 0
      %1583 = vmatpush.bf16.msra.mxu0 0
      %1584 = vmatpush.bf16.msra.mxu0 0
      %1585 = vmatpush.bf16.msra.mxu0 0
      %1586 = vmatpush.bf16.msra.mxu0 0
      %1587 = vmatpush.bf16.msra.mxu0 0
      %1588 = vmatpush.bf16.msra.mxu0 0
      %1589 = vmatpush.bf16.msra.mxu0 %v1580
      %1590 = vmatmul.bf16.gmra.mxu0 %v1577
      %v1591 = vpop.f32.mrf.mxu0
      %v1592 = vadd.f32 0.0, %v1591
      %v1593 = vpop.f32.mrf.mxu0
      %1594 = vdwg.mxu0
      %v1596 = vsel %vm411, %v1382, 0
      %v1599 = vsel %vm1407, %v368, 0
      %1601 = vmatpush.bf16.msra.mxu0 0
      %1602 = vmatpush.bf16.msra.mxu0 0
      %1603 = vmatpush.bf16.msra.mxu0 0
      %1604 = vmatpush.bf16.msra.mxu0 0
      %1605 = vmatpush.bf16.msra.mxu0 0
      %1606 = vmatpush.bf16.msra.mxu0 0
      %1607 = vmatpush.bf16.msra.mxu0 0
      %1608 = vmatpush.bf16.msra.mxu0 %v1599
      %1609 = vmatmul.bf16.gmra.mxu0 %v1596
      %v1610 = vpop.f32.mrf.mxu0
      %v1611 = vadd.f32 0.0, %v1610
      %v1612 = vpop.f32.mrf.mxu0
      %1613 = vdwg.mxu0
      %v1615 = vsel %vm411, %v1383, 0
      %v1618 = vsel %vm1407, %v370, 0
      %1620 = vmatpush.bf16.msra.mxu0 0
      %1621 = vmatpush.bf16.msra.mxu0 0
      %1622 = vmatpush.bf16.msra.mxu0 0
      %1623 = vmatpush.bf16.msra.mxu0 0
      %1624 = vmatpush.bf16.msra.mxu0 0
      %1625 = vmatpush.bf16.msra.mxu0 0
      %1626 = vmatpush.bf16.msra.mxu0 0
      %1627 = vmatpush.bf16.msra.mxu0 %v1618
      %1628 = vmatmul.bf16.gmra.mxu0 %v1615
      %v1629 = vpop.f32.mrf.mxu0
      %v1630 = vadd.f32 0.0, %v1629
      %v1631 = vpop.f32.mrf.mxu0
      %1632 = vdwg.mxu0
      %v1634 = vsel %vm411, %v1384, 0
      %v1637 = vsel %vm1407, %v372, 0
      %1639 = vmatpush.bf16.msra.mxu0 0
      %1640 = vmatpush.bf16.msra.mxu0 0
      %1641 = vmatpush.bf16.msra.mxu0 0
      %1642 = vmatpush.bf16.msra.mxu0 0
      %1643 = vmatpush.bf16.msra.mxu0 0
      %1644 = vmatpush.bf16.msra.mxu0 0
      %1645 = vmatpush.bf16.msra.mxu0 0
      %1646 = vmatpush.bf16.msra.mxu0 %v1637
      %1647 = vmatmul.bf16.gmra.mxu0 %v1634
      %v1648 = vpop.f32.mrf.mxu0
      %v1649 = vadd.f32 0.0, %v1648
      %v1650 = vpop.f32.mrf.mxu0
      %1651 = vdwg.mxu0
      %v1653 = vsel %vm411, %v1385, 0
      %v1656 = vsel %vm1407, %v374, 0
      %1658 = vmatpush.bf16.msra.mxu0 0
      %1659 = vmatpush.bf16.msra.mxu0 0
      %1660 = vmatpush.bf16.msra.mxu0 0
      %1661 = vmatpush.bf16.msra.mxu0 0
      %1662 = vmatpush.bf16.msra.mxu0 0
      %1663 = vmatpush.bf16.msra.mxu0 0
      %1664 = vmatpush.bf16.msra.mxu0 0
      %1665 = vmatpush.bf16.msra.mxu0 %v1656
      %1666 = vmatmul.bf16.gmra.mxu0 %v1653
      %v1667 = vpop.f32.mrf.mxu0
      %v1668 = vadd.f32 0.0, %v1667
      %v1669 = vpop.f32.mrf.mxu0
      %1670 = vdwg.mxu0
      %v1672 = vsel %vm411, %v1386, 0
      %v1675 = vsel %vm1407, %v376, 0
      %1677 = vmatpush.bf16.msra.mxu0 0
      %1678 = vmatpush.bf16.msra.mxu0 0
      %1679 = vmatpush.bf16.msra.mxu0 0
      %1680 = vmatpush.bf16.msra.mxu0 0
      %1681 = vmatpush.bf16.msra.mxu0 0
      %1682 = vmatpush.bf16.msra.mxu0 0
      %1683 = vmatpush.bf16.msra.mxu0 0
      %1684 = vmatpush.bf16.msra.mxu0 %v1675
      %1685 = vmatmul.bf16.gmra.mxu0 %v1672
      %v1686 = vpop.f32.mrf.mxu0
      %v1687 = vadd.f32 0.0, %v1686
      %v1688 = vpop.f32.mrf.mxu0
      %1689 = vdwg.mxu0
      %v1691 = vsel %vm411, %v1387, 0
      %v1694 = vsel %vm1407, %v378, 0
      %1696 = vmatpush.bf16.msra.mxu0 0
      %1697 = vmatpush.bf16.msra.mxu0 0
      %1698 = vmatpush.bf16.msra.mxu0 0
      %1699 = vmatpush.bf16.msra.mxu0 0
      %1700 = vmatpush.bf16.msra.mxu0 0
      %1701 = vmatpush.bf16.msra.mxu0 0
      %1702 = vmatpush.bf16.msra.mxu0 0
      %1703 = vmatpush.bf16.msra.mxu0 %v1694
      %1704 = vmatmul.bf16.gmra.mxu0 %v1691
      %v1705 = vpop.f32.mrf.mxu0
      %v1706 = vadd.f32 0.0, %v1705
      %v1707 = vpop.f32.mrf.mxu0
      %1708 = vdwg.mxu0
      %v1710 = vsel %vm411, %v1388, 0
      %v1713 = vsel %vm1407, %v380, 0
      %1715 = vmatpush.bf16.msra.mxu0 0
      %1716 = vmatpush.bf16.msra.mxu0 0
      %1717 = vmatpush.bf16.msra.mxu0 0
      %1718 = vmatpush.bf16.msra.mxu0 0
      %1719 = vmatpush.bf16.msra.mxu0 0
      %1720 = vmatpush.bf16.msra.mxu0 0
      %1721 = vmatpush.bf16.msra.mxu0 0
      %1722 = vmatpush.bf16.msra.mxu0 %v1713
      %1723 = vmatmul.bf16.gmra.mxu0 %v1710
      %v1724 = vpop.f32.mrf.mxu0
      %v1725 = vadd.f32 0.0, %v1724
      %v1726 = vpop.f32.mrf.mxu0
      %1727 = vdwg.mxu0
      %v1729 = vsel %vm411, %v1389, 0
      %v1732 = vsel %vm1407, %v382, 0
      %1734 = vmatpush.bf16.msra.mxu0 0
      %1735 = vmatpush.bf16.msra.mxu0 0
      %1736 = vmatpush.bf16.msra.mxu0 0
      %1737 = vmatpush.bf16.msra.mxu0 0
      %1738 = vmatpush.bf16.msra.mxu0 0
      %1739 = vmatpush.bf16.msra.mxu0 0
      %1740 = vmatpush.bf16.msra.mxu0 0
      %1741 = vmatpush.bf16.msra.mxu0 %v1732
      %1742 = vmatmul.bf16.gmra.mxu0 %v1729
      %v1743 = vpop.f32.mrf.mxu0
      %v1744 = vadd.f32 0.0, %v1743
      %v1745 = vpop.f32.mrf.mxu0
      %1746 = vdwg.mxu0
      %v1748 = vsel %vm411, %v1390, 0
      %v1751 = vsel %vm1407, %v384, 0
      %1753 = vmatpush.bf16.msra.mxu0 0
      %1754 = vmatpush.bf16.msra.mxu0 0
      %1755 = vmatpush.bf16.msra.mxu0 0
      %1756 = vmatpush.bf16.msra.mxu0 0
      %1757 = vmatpush.bf16.msra.mxu0 0
      %1758 = vmatpush.bf16.msra.mxu0 0
      %1759 = vmatpush.bf16.msra.mxu0 0
      %1760 = vmatpush.bf16.msra.mxu0 %v1751
      %1761 = vmatmul.bf16.gmra.mxu0 %v1748
      %v1762 = vpop.f32.mrf.mxu0
      %v1763 = vadd.f32 0.0, %v1762
      %v1764 = vpop.f32.mrf.mxu0
      %1765 = vdwg.mxu0
      %v1767 = vsel %vm411, %v1391, 0
      %v1770 = vsel %vm1407, %v386, 0
      %1772 = vmatpush.bf16.msra.mxu0 0
      %1773 = vmatpush.bf16.msra.mxu0 0
      %1774 = vmatpush.bf16.msra.mxu0 0
      %1775 = vmatpush.bf16.msra.mxu0 0
      %1776 = vmatpush.bf16.msra.mxu0 0
      %1777 = vmatpush.bf16.msra.mxu0 0
      %1778 = vmatpush.bf16.msra.mxu0 0
      %1779 = vmatpush.bf16.msra.mxu0 %v1770
      %1780 = vmatmul.bf16.gmra.mxu0 %v1767
      %v1781 = vpop.f32.mrf.mxu0
      %v1782 = vadd.f32 0.0, %v1781
      %v1783 = vpop.f32.mrf.mxu0
      %1784 = vdwg.mxu0
      %v1786 = vsel %vm411, %v1392, 0
      %v1789 = vsel %vm1407, %v388, 0
      %1791 = vmatpush.bf16.msra.mxu0 0
      %1792 = vmatpush.bf16.msra.mxu0 0
      %1793 = vmatpush.bf16.msra.mxu0 0
      %1794 = vmatpush.bf16.msra.mxu0 0
      %1795 = vmatpush.bf16.msra.mxu0 0
      %1796 = vmatpush.bf16.msra.mxu0 0
      %1797 = vmatpush.bf16.msra.mxu0 0
      %1798 = vmatpush.bf16.msra.mxu0 %v1789
      %1799 = vmatmul.bf16.gmra.mxu0 %v1786
      %v1800 = vpop.f32.mrf.mxu0
      %v1801 = vadd.f32 0.0, %v1800
      %v1802 = vpop.f32.mrf.mxu0
      %1803 = vdwg.mxu0
      %v1805 = vsel %vm411, %v1393, 0
      %v1808 = vsel %vm1407, %v390, 0
      %1810 = vmatpush.bf16.msra.mxu0 0
      %1811 = vmatpush.bf16.msra.mxu0 0
      %1812 = vmatpush.bf16.msra.mxu0 0
      %1813 = vmatpush.bf16.msra.mxu0 0
      %1814 = vmatpush.bf16.msra.mxu0 0
      %1815 = vmatpush.bf16.msra.mxu0 0
      %1816 = vmatpush.bf16.msra.mxu0 0
      %1817 = vmatpush.bf16.msra.mxu0 %v1808
      %1818 = vmatmul.bf16.gmra.mxu0 %v1805
      %v1819 = vpop.f32.mrf.mxu0
      %v1820 = vadd.f32 0.0, %v1819
      %v1821 = vpop.f32.mrf.mxu0
      %1822 = vdwg.mxu0
      %v1824 = vsel %vm411, %v1394, 0
      %v1827 = vsel %vm1407, %v392, 0
      %1829 = vmatpush.bf16.msra.mxu0 0
      %1830 = vmatpush.bf16.msra.mxu0 0
      %1831 = vmatpush.bf16.msra.mxu0 0
      %1832 = vmatpush.bf16.msra.mxu0 0
      %1833 = vmatpush.bf16.msra.mxu0 0
      %1834 = vmatpush.bf16.msra.mxu0 0
      %1835 = vmatpush.bf16.msra.mxu0 0
      %1836 = vmatpush.bf16.msra.mxu0 %v1827
      %1837 = vmatmul.bf16.gmra.mxu0 %v1824
      %v1838 = vpop.f32.mrf.mxu0
      %v1839 = vadd.f32 0.0, %v1838
      %v1840 = vpop.f32.mrf.mxu0
      %1841 = vdwg.mxu0
      %v1843 = vsel %vm411, %v1395, 0
      %v1846 = vsel %vm1407, %v394, 0
      %1848 = vmatpush.bf16.msra.mxu0 0
      %1849 = vmatpush.bf16.msra.mxu0 0
      %1850 = vmatpush.bf16.msra.mxu0 0
      %1851 = vmatpush.bf16.msra.mxu0 0
      %1852 = vmatpush.bf16.msra.mxu0 0
      %1853 = vmatpush.bf16.msra.mxu0 0
      %1854 = vmatpush.bf16.msra.mxu0 0
      %1855 = vmatpush.bf16.msra.mxu0 %v1846
      %1856 = vmatmul.bf16.gmra.mxu0 %v1843
      %v1857 = vpop.f32.mrf.mxu0
      %v1858 = vadd.f32 0.0, %v1857
      %v1859 = vpop.f32.mrf.mxu0
      %1860 = vdwg.mxu0
      %v1862 = vsel %vm411, %v1396, 0
      %v1865 = vsel %vm1407, %v396, 0
      %1867 = vmatpush.bf16.msra.mxu0 0
      %1868 = vmatpush.bf16.msra.mxu0 0
      %1869 = vmatpush.bf16.msra.mxu0 0
      %1870 = vmatpush.bf16.msra.mxu0 0
      %1871 = vmatpush.bf16.msra.mxu0 0
      %1872 = vmatpush.bf16.msra.mxu0 0
      %1873 = vmatpush.bf16.msra.mxu0 0
      %1874 = vmatpush.bf16.msra.mxu0 %v1865
      %1875 = vmatmul.bf16.gmra.mxu0 %v1862
      %v1876 = vpop.f32.mrf.mxu0
      %v1877 = vadd.f32 0.0, %v1876
      %v1878 = vpop.f32.mrf.mxu0
      %1879 = vdwg.mxu0
      %v1881 = vsel %vm411, %v1397, 0
      %v1884 = vsel %vm1407, %v398, 0
      %1886 = vmatpush.bf16.msra.mxu0 0
      %1887 = vmatpush.bf16.msra.mxu0 0
      %1888 = vmatpush.bf16.msra.mxu0 0
      %1889 = vmatpush.bf16.msra.mxu0 0
      %1890 = vmatpush.bf16.msra.mxu0 0
      %1891 = vmatpush.bf16.msra.mxu0 0
      %1892 = vmatpush.bf16.msra.mxu0 0
      %1893 = vmatpush.bf16.msra.mxu0 %v1884
      %1894 = vmatmul.bf16.gmra.mxu0 %v1881
      %v1895 = vpop.f32.mrf.mxu0
      %v1896 = vadd.f32 0.0, %v1895
      %v1897 = vpop.f32.mrf.mxu0
      %1898 = vdwg.mxu0
      %v1900 = vsel %vm411, %v1398, 0
      %v1903 = vsel %vm1407, %v400, 0
      %1905 = vmatpush.bf16.msra.mxu0 0
      %1906 = vmatpush.bf16.msra.mxu0 0
      %1907 = vmatpush.bf16.msra.mxu0 0
      %1908 = vmatpush.bf16.msra.mxu0 0
      %1909 = vmatpush.bf16.msra.mxu0 0
      %1910 = vmatpush.bf16.msra.mxu0 0
      %1911 = vmatpush.bf16.msra.mxu0 0
      %1912 = vmatpush.bf16.msra.mxu0 %v1903
      %1913 = vmatmul.bf16.gmra.mxu0 %v1900
      %v1914 = vpop.f32.mrf.mxu0
      %v1915 = vadd.f32 0.0, %v1914
      %v1916 = vpop.f32.mrf.mxu0
      %1917 = vdwg.mxu0
      %v1919 = vsel %vm411, %v1399, 0
      %v1922 = vsel %vm1407, %v402, 0
      %1924 = vmatpush.bf16.msra.mxu0 0
      %1925 = vmatpush.bf16.msra.mxu0 0
      %1926 = vmatpush.bf16.msra.mxu0 0
      %1927 = vmatpush.bf16.msra.mxu0 0
      %1928 = vmatpush.bf16.msra.mxu0 0
      %1929 = vmatpush.bf16.msra.mxu0 0
      %1930 = vmatpush.bf16.msra.mxu0 0
      %1931 = vmatpush.bf16.msra.mxu0 %v1922
      %1932 = vmatmul.bf16.gmra.mxu0 %v1919
      %v1933 = vpop.f32.mrf.mxu0
      %v1934 = vadd.f32 0.0, %v1933
      %v1935 = vpop.f32.mrf.mxu0
      %1936 = vdwg.mxu0
      %v1938 = vsel %vm411, %v1400, 0
      %v1941 = vsel %vm1407, %v404, 0
      %1943 = vmatpush.bf16.msra.mxu0 0
      %1944 = vmatpush.bf16.msra.mxu0 0
      %1945 = vmatpush.bf16.msra.mxu0 0
      %1946 = vmatpush.bf16.msra.mxu0 0
      %1947 = vmatpush.bf16.msra.mxu0 0
      %1948 = vmatpush.bf16.msra.mxu0 0
      %1949 = vmatpush.bf16.msra.mxu0 0
      %1950 = vmatpush.bf16.msra.mxu0 %v1941
      %1951 = vmatmul.bf16.gmra.mxu0 %v1938
      %v1952 = vpop.f32.mrf.mxu0
      %v1953 = vadd.f32 0.0, %v1952
      %v1954 = vpop.f32.mrf.mxu0
      %1955 = vdwg.mxu0
      %v1957 = vsel %vm411, %v1401, 0
      %v1960 = vsel %vm1407, %v406, 0
      %1962 = vmatpush.bf16.msra.mxu0 0
      %1963 = vmatpush.bf16.msra.mxu0 0
      %1964 = vmatpush.bf16.msra.mxu0 0
      %1965 = vmatpush.bf16.msra.mxu0 0
      %1966 = vmatpush.bf16.msra.mxu0 0
      %1967 = vmatpush.bf16.msra.mxu0 0
      %1968 = vmatpush.bf16.msra.mxu0 0
      %1969 = vmatpush.bf16.msra.mxu0 %v1960
      %1970 = vmatmul.bf16.gmra.mxu0 %v1957
      %v1971 = vpop.f32.mrf.mxu0
      %v1972 = vadd.f32 0.0, %v1971
      %v1973 = vpop.f32.mrf.mxu0
      %1974 = vdwg.mxu0
      %v1976 = vsel %vm411, %v1402, 0
      %v1979 = vsel %vm1407, %v408, 0
      %1981 = vmatpush.bf16.msra.mxu0 0
      %1982 = vmatpush.bf16.msra.mxu0 0
      %1983 = vmatpush.bf16.msra.mxu0 0
      %1984 = vmatpush.bf16.msra.mxu0 0
      %1985 = vmatpush.bf16.msra.mxu0 0
      %1986 = vmatpush.bf16.msra.mxu0 0
      %1987 = vmatpush.bf16.msra.mxu0 0
      %1988 = vmatpush.bf16.msra.mxu0 %v1979
      %1989 = vmatmul.bf16.gmra.mxu0 %v1976
      %v1990 = vpop.f32.mrf.mxu0
      %v1991 = vadd.f32 0.0, %v1990
      %v1992 = vpop.f32.mrf.mxu0
      %1993 = vdwg.mxu0
      %v1995 = vsel %vm411, %v1403, 0
      %v1998 = vsel %vm1407, %v410, 0
      %2000 = vmatpush.bf16.msra.mxu0 0
      %2001 = vmatpush.bf16.msra.mxu0 0
      %2002 = vmatpush.bf16.msra.mxu0 0
      %2003 = vmatpush.bf16.msra.mxu0 0
      %2004 = vmatpush.bf16.msra.mxu0 0
      %2005 = vmatpush.bf16.msra.mxu0 0
      %2006 = vmatpush.bf16.msra.mxu0 0
      %2007 = vmatpush.bf16.msra.mxu0 %v1998
      %2008 = vmatmul.bf16.gmra.mxu0 %v1995
      %v2009 = vpop.f32.mrf.mxu0
      %v2010 = vadd.f32 0.0, %v2009
      %v2011 = vpop.f32.mrf.mxu0
      %2012 = vdwg.mxu0
      %2021 = vrot.lane.b32.xlu0 %v1573, 8
      %v2022 = vpop.permute.xlu0 %2021
      %2023 = vrot.lane.b32.xlu0 %v1592, 8
      %v2024 = vpop.permute.xlu0 %2023
      %2025 = vrot.lane.b32.xlu0 %v1611, 8
      %v2026 = vpop.permute.xlu0 %2025
      %2027 = vrot.lane.b32.xlu0 %v1630, 8
      %v2028 = vpop.permute.xlu0 %2027
      %2029 = vrot.lane.b32.xlu0 %v1649, 8
      %v2030 = vpop.permute.xlu0 %2029
      %2031 = vrot.lane.b32.xlu0 %v1668, 8
      %v2032 = vpop.permute.xlu0 %2031
      %2033 = vrot.lane.b32.xlu0 %v1687, 8
      %v2034 = vpop.permute.xlu0 %2033
      %2035 = vrot.lane.b32.xlu0 %v1706, 8
      %v2036 = vpop.permute.xlu0 %2035
      %2053 = vrot.lane.b32.xlu0 %v1725, 16
      %v2054 = vpop.permute.xlu0 %2053
      %2055 = vrot.lane.b32.xlu0 %v1744, 16
      %v2056 = vpop.permute.xlu0 %2055
      %2057 = vrot.lane.b32.xlu0 %v1763, 16
      %v2058 = vpop.permute.xlu0 %2057
      %2059 = vrot.lane.b32.xlu0 %v1782, 16
      %v2060 = vpop.permute.xlu0 %2059
      %2061 = vrot.lane.b32.xlu0 %v1801, 16
      %v2062 = vpop.permute.xlu0 %2061
      %2063 = vrot.lane.b32.xlu0 %v1820, 16
      %v2064 = vpop.permute.xlu0 %2063
      %2065 = vrot.lane.b32.xlu0 %v1839, 16
      %v2066 = vpop.permute.xlu0 %2065
      %2067 = vrot.lane.b32.xlu0 %v1858, 16
      %v2068 = vpop.permute.xlu0 %2067
      %2085 = vrot.lane.b32.xlu0 %v1877, 24
      %v2086 = vpop.permute.xlu0 %2085
      %2087 = vrot.lane.b32.xlu0 %v1896, 24
      %v2088 = vpop.permute.xlu0 %2087
      %2089 = vrot.lane.b32.xlu0 %v1915, 24
      %v2090 = vpop.permute.xlu0 %2089
      %2091 = vrot.lane.b32.xlu0 %v1934, 24
      %v2092 = vpop.permute.xlu0 %2091
      %2093 = vrot.lane.b32.xlu0 %v1953, 24
      %v2094 = vpop.permute.xlu0 %2093
      %2095 = vrot.lane.b32.xlu0 %v1972, 24
      %v2096 = vpop.permute.xlu0 %2095
      %2097 = vrot.lane.b32.xlu0 %v1991, 24
      %v2098 = vpop.permute.xlu0 %2097
      %2099 = vrot.lane.b32.xlu0 %v2010, 24
      %v2100 = vpop.permute.xlu0 %2099
      %v2109 = vsel %vm411, %v1421, %v2022
      %v2110 = vsel %vm411, %v1440, %v2024
      %v2111 = vsel %vm411, %v1459, %v2026
      %v2112 = vsel %vm411, %v1478, %v2028
      %v2113 = vsel %vm411, %v1497, %v2030
      %v2114 = vsel %vm411, %v1516, %v2032
      %v2115 = vsel %vm411, %v1535, %v2034
      %v2116 = vsel %vm411, %v1554, %v2036
      %vm2117 = vcmask 130048
      %v2118 = vsel %vm2117, %v2109, %v2054
      %v2119 = vsel %vm2117, %v2110, %v2056
      %v2120 = vsel %vm2117, %v2111, %v2058
      %v2121 = vsel %vm2117, %v2112, %v2060
      %v2122 = vsel %vm2117, %v2113, %v2062
      %v2123 = vsel %vm2117, %v2114, %v2064
      %v2124 = vsel %vm2117, %v2115, %v2066
      %v2125 = vsel %vm2117, %v2116, %v2068
      %vm2126 = vcmask 195584
      %v2127 = vsel %vm2126, %v2118, %v2086
      %v2128 = vsel %vm2126, %v2119, %v2088
      %v2129 = vsel %vm2126, %v2120, %v2090
      %v2130 = vsel %vm2126, %v2121, %v2092
      %v2131 = vsel %vm2126, %v2122, %v2094
      %v2132 = vsel %vm2126, %v2123, %v2096
      %v2133 = vsel %vm2126, %v2124, %v2098
      %v2134 = vsel %vm2126, %v2125, %v2100
      %v2135 = vpack.c.bf16 %v2127, %v2127
      %v2136 = vpack.c.bf16 %v2128, %v2128
      %v2137 = vpack.c.bf16 %v2129, %v2129
      %v2138 = vpack.c.bf16 %v2130, %v2130
      %v2139 = vpack.c.bf16 %v2131, %v2131
      %v2140 = vpack.c.bf16 %v2132, %v2132
      %v2141 = vpack.c.bf16 %v2133, %v2133
      %v2142 = vpack.c.bf16 %v2134, %v2134
      %vm2143 = vcmask 257024
      %2144 = vst.msk [vmem:[%s216] sm:$0xf] %vm2143, %v2135
      %2145 = vst.msk [vmem:[%s216 + $0x4] sm:$0xf] %vm2143, %v2136
      %2146 = vst.msk [vmem:[%s216 + $0x8] sm:$0xf] %vm2143, %v2137
      %2147 = vst.msk [vmem:[%s216 + $0xc] sm:$0xf] %vm2143, %v2138
      %2148 = vst.msk [vmem:[%s216 + $0x10] sm:$0xf] %vm2143, %v2139
      %2149 = vst.msk [vmem:[%s216 + $0x14] sm:$0xf] %vm2143, %v2140
      %2150 = vst.msk [vmem:[%s216 + $0x18] sm:$0xf] %vm2143, %v2141
      %2151 = vst.msk [vmem:[%s216 + $0x1c] sm:$0xf] %vm2143, %v2142
      %s2152 = smul.u32 8, %s14
      %p2153 = scmp.lt.s32.totalorder %s2152, 15
      %s2154 = scalar_select %p2153, %s2152, 15
      %s2155 = smul.addr %s2154, 4
      %s2156 = scalar_lea.vmem %s3, %s2155
      // Predicated region
      $region33: #{_lambda_.4} parent=31 // pred_check
        %p2157 = pneg %p110
      $region34: #{_lambda_.4} parent=31 // pred_check_branch
        %2159 = sbr.rel (%p2157) target = $region36
      $region35: #{_lambda_.4} parent=31 // pred_region
        %s2160 = smul.u32 8, %s14
      $region36: #{_lambda_.4} parent=31 // pred_fallthru
        _
    $region32: #{_lambda_.4} parent=5 // pred_fallthru
      _
    %p2161 = scmp.le.s32.totalorder 2, %s9
    // Predicated region
    $region37: #{_lambda_.4} parent=5 // pred_check
      %p2162 = pneg %p2161
    $region38: #{_lambda_.4} parent=5 // pred_check_branch
      %2164 = sbr.rel (%p2162) target = $region40
    $region39: #{_lambda_.4} parent=5 // pred_region
      %s2165 = ssub.s32 %s9, 2
      // Predicated region
      $region41: #{_lambda_.4} parent=39 // pred_check
        %p2166 = pneg %p116
      $region42: #{_lambda_.4} parent=39 // pred_check_branch
        %2168 = sbr.rel (%p2166) target = $region44
      $region43: #{_lambda_.4} parent=39 // pred_region
        %s2169 = smul.u32 8, %s15
        %p2170 = scmp.lt.s32.totalorder %s2169, 15
        %s2171 = scalar_select %p2170, %s2169, 15
        %s2172 = smul.addr %s2171, 4
        %s2173 = scalar_lea.vmem %s3, %s2172
      $region44: #{_lambda_.4} parent=39 // pred_fallthru
        _
    $region40: #{_lambda_.4} parent=5 // pred_fallthru
      _
  $region6: #{_lambda_.4} parent=0 // loop_footer
    %s13 = sadd.s32 1, %s9
  $region7: #{_lambda_.4} parent=0 // loop_footer_branch
    %8 = sbr.rel target = $region3
  $region8: #{_lambda_.4} parent=0 // loop_exit
    _

</llo_original>
